<compile_context>
chip_gen: v5e
topology: v5e:2x2
jax: 0.10.0
libtpu: 0.0.40
codegen_flags: <defaults>
</compile_context>

<pallas_src>
import math
import functools

import jax
import jax.numpy as jnp
from jax import lax
from jax.experimental import pallas as pl
from jax.experimental.pallas import tpu as pltpu

EPS = 1e-12  # F.normalize default eps


def _wnorm_gram_kernel(label_ref, w_ref, wnt_ref, loss_ref):
    """Normalize weight once, Gram-matrix weight loss, emit w_n^T (bf16)."""
    w = w_ref[...].astype(jnp.float32)                    # (C, D)
    # F.normalize: w / max(||w||, eps) == w * rsqrt(max(||w||^2, eps^2))
    inv_norm = lax.rsqrt(
        jnp.maximum(jnp.sum(w * w, axis=-1, keepdims=True), EPS * EPS))
    w_n = w * inv_norm                                    # (C, D), unit rows

    # Pre-transposed bf16 copy consumed by the tiled logits kernel.
    wnt_ref[...] = w_n.T.astype(jnp.bfloat16)             # (D, C)

    # weight_loss: min_{j != c} ||w_n[c] - w_n[j]||^2 via one MXU Gram matmul.
    gram = lax.dot_general(w_n, w_n, (((1,), (1,)), ((), ())),
                           preferred_element_type=jnp.float32)   # (C, C) cos
    dist = jnp.maximum(2.0 - 2.0 * gram, 0.0)             # squared distances
    C = dist.shape[0]
    row_ids = lax.broadcasted_iota(jnp.int32, (C, C), 0)
    col_ids = lax.broadcasted_iota(jnp.int32, (C, C), 1)
    # Reference maps exactly-zero distances (the self term) to 1000:
    # mask the diagonal explicitly (robust under the Gram formulation).
    dist = jnp.where(row_ids == col_ids, jnp.float32(1000.0), dist)
    min_d = jnp.min(dist, axis=0, keepdims=True)          # (1, C); dist symmetric

    # total = sum_i min_d[label[i]] via a one-hot weighting (no serial gather).
    B = label_ref.shape[0]
    lane_ids = lax.broadcasted_iota(jnp.int32, (B, C), 1)
    sel = (lane_ids == label_ref[...]).astype(jnp.float32)     # (B, C)
    total = jnp.sum(sel * min_d)
    loss_ref[0, 0] = jnp.float32(B) / total


def _arcface_kernel(label_ref, x_ref, wnt_ref, out_ref, xn_ref, *,
                    s, cos_m, sin_m, th, mm, easy_margin):
    """One (tB, tC) logits tile: per-B-tile x normalization, MXU cosine,
    ArcFace margin, one-hot mix, scale."""
    j = pl.program_id(1)

    @pl.when(j == 0)
    def _():
        x = x_ref[...].astype(jnp.float32)                # (tB, D)
        inv_norm = lax.rsqrt(
            jnp.maximum(jnp.sum(x * x, axis=-1, keepdims=True), EPS * EPS))
        xn_ref[...] = x * inv_norm                        # cached for all C-tiles

    # bf16 MXU inputs, f32 accumulation.
    cosine = jnp.dot(xn_ref[...].astype(jnp.bfloat16), wnt_ref[...],
                     preferred_element_type=jnp.float32)  # (tB, tC)

    sine = jnp.sqrt(jnp.clip(1.0 - cosine * cosine, 0.0, 1.0))
    phi = cosine * cos_m - sine * sin_m
    if easy_margin:
        phi = jnp.where(cosine > 0.0, phi, cosine)
    else:
        phi = jnp.where(cosine > th, phi, cosine - mm)

    tb, tc = cosine.shape
    col_ids = lax.broadcasted_iota(jnp.int32, (tb, tc), 1) + j * tc
    one_hot = (col_ids == label_ref[...]).astype(jnp.float32)   # label_ref (tB,1)

    out_ref[...] = (s * (one_hot * phi + (1.0 - one_hot) * cosine)).astype(
        out_ref.dtype)


def _pick_tile(n, preferred):
    for t in preferred:
        if t <= n and n % t == 0:
            return t
    return n


def my_loss_forward(x, weight, label, *, s=30.0, m=0.3, easy_margin=True,
                    block_b=128, block_c=512):
    B, D = x.shape
    C, D2 = weight.shape
    assert D == D2
    cos_m = math.cos(m)
    sin_m = math.sin(m)
    th = math.cos(math.pi - m)
    mm = math.sin(math.pi - m) * m

    label_col = label.astype(jnp.int32).reshape(B, 1)

    # ---- Pass 1: normalize weight once + Gram-matrix weight loss ----------
    # TODO(synk): tile the Gram pass over class-row tiles for very large C
    # (this pass holds C*D and C*C in VMEM; fine for moderate class counts).
    wnt, wloss = pl.pallas_call(
        _wnorm_gram_kernel,
        out_shape=(jax.ShapeDtypeStruct((D, C), jnp.bfloat16),
                   jax.ShapeDtypeStruct((1, 1), jnp.float32)),
        in_specs=[
            pl.BlockSpec(memory_space=pltpu.MemorySpace.VMEM),   # label (B,1)
            pl.BlockSpec(memory_space=pltpu.MemorySpace.VMEM),   # weight (C,D)
        ],
        out_specs=(pl.BlockSpec(memory_space=pltpu.MemorySpace.VMEM),
                   pl.BlockSpec(memory_space=pltpu.MemorySpace.SMEM)),
    )(label_col, weight)

    # ---- Pass 2: tiled ArcFace logits --------------------------------------
    tB = _pick_tile(B, (block_b, 64, 32, 16, 8))
    tC = _pick_tile(C, (block_c, 1024, 512, 256, 128))
    grid = (B // tB, C // tC)

    output = pl.pallas_call(
        functools.partial(_arcface_kernel, s=s, cos_m=cos_m, sin_m=sin_m,
                          th=th, mm=mm, easy_margin=easy_margin),
        out_shape=jax.ShapeDtypeStruct((B, C), jnp.float32),
        grid_spec=pltpu.PrefetchScalarGridSpec(
            num_scalar_prefetch=0,
            grid=grid,
            in_specs=[
                pl.BlockSpec((tB, 1), lambda i, j: (i, 0)),    # labels
                pl.BlockSpec((tB, D), lambda i, j: (i, 0)),    # x
                pl.BlockSpec((D, tC), lambda i, j: (0, j)),    # w_n^T (bf16)
            ],
            out_specs=pl.BlockSpec((tB, tC), lambda i, j: (i, j)),
            scratch_shapes=[pltpu.VMEM((tB, D), jnp.float32)],  # x_n per B-tile
        ),
        compiler_params=pltpu.CompilerParams(
            # B-tile axis independent -> "parallel" (megacore on v7x);
            # C-tile axis carries the x_n scratch init -> "arbitrary".
            dimension_semantics=("parallel", "arbitrary")),
    )(label_col, x, wnt)

    return output, wloss[0, 0]


# ---------------------------- host-side helpers ------------------------------
def xavier_uniform(key, shape, dtype=jnp.float32):
    fan_out, fan_in = shape
    bound = math.sqrt(6.0 / (fan_in + fan_out))
    return jax.random.uniform(key, shape, dtype, minval=-bound, maxval=bound)


def _reference(x, w, label, *, s, m, easy_margin):
    """Pure-JAX f32 reference mirroring the PyTorch module."""
    cos_m, sin_m = math.cos(m), math.sin(m)
    th = math.cos(math.pi - m)
    mm = math.sin(math.pi - m) * m
    x_n = x / jnp.maximum(jnp.linalg.norm(x, axis=-1, keepdims=True), EPS)
    w_n = w / jnp.maximum(jnp.linalg.norm(w, axis=-1, keepdims=True), EPS)
    cosine = jnp.dot(x_n, w_n.T, precision=lax.Precision.HIGHEST)
    sine = jnp.sqrt(jnp.clip(1.0 - cosine * cosine, 0.0, 1.0))
    phi = cosine * cos_m - sine * sin_m
    if easy_margin:
        phi = jnp.where(cosine > 0.0, phi, cosine)
    else:
        phi = jnp.where(cosine > th, phi, cosine - mm)
    one_hot = jax.nn.one_hot(label, w.shape[0], dtype=jnp.float32)
    out = s * (one_hot * phi + (1.0 - one_hot) * cosine)
    wl = w_n[label]                                               # (B, D)
    dist = jnp.sum((wl[:, None, :] - w_n[None, :, :]) ** 2, axis=-1)
    vals = jnp.where(dist == 0.0, jnp.float32(1000.0), dist)
    wloss = label.shape[0] / jnp.sum(jnp.min(vals, axis=1))
    return out, wloss


if __name__ == "__main__":
    # Small but tiling-exercising shapes; in_features=512 matches the module's
    # hardcoded 512 in _weight_loss.
    B, D, C = 16, 512, 256

    key = jax.random.PRNGKey(0)
    kx, kw, kl = jax.random.split(key, 3)
    x = jax.random.normal(kx, (B, D), dtype=jnp.float32)
    weight = xavier_uniform(kw, (C, D))
    label = jax.random.randint(kl, (B,), 0, C, dtype=jnp.int32)

    out, wloss = my_loss_forward(x, weight, label, s=30.0, m=0.3,
                                 easy_margin=True, block_b=8, block_c=128)
    jax.block_until_ready((out, wloss))

    assert out.shape == (B, C) and out.dtype == jnp.float32
    assert wloss.shape == () and bool(jnp.isfinite(wloss))
    assert bool(jnp.all(jnp.isfinite(out)))

    ref_out, ref_wloss = _reference(x, weight, label, s=30.0, m=0.3,
                                    easy_margin=True)
    # bf16 MXU inputs => small absolute error on logits; only the B label
    # entries go through the (discontinuous at cosine==0) margin branch, so
    # require 99.5% of elements within tolerance to stay robust to a rare
    # branch flip exactly at the threshold.
    close_frac = float(jnp.mean(jnp.abs(out - ref_out) <= 0.3))
    assert close_frac >= 0.995, f"logit mismatch fraction too high: {close_frac}"
    rel_err = abs(float(wloss) - float(ref_wloss)) / max(abs(float(ref_wloss)), 1e-12)
    assert rel_err <= 1e-3, f"weight_loss rel err {rel_err}"

    print("KERNEL_OK")
</pallas_src>

<mosaic_0001>
module attributes {stable_mosaic.version = 11 : i64} {
  func.func @_wnorm_gram_kernel(%arg0: memref<16x1xi32, #tpu.memory_space<vmem>>, %arg1: memref<256x512xf32, #tpu.memory_space<vmem>>, %arg2: memref<512x256xbf16, #tpu.memory_space<vmem>>, %arg3: memref<1x1xf32, #tpu.memory_space<smem>>) attributes {dimension_semantics = [], scalar_prefetch = 0 : i64, scratch_operands = 0 : i64, tpu.core_type = #tpu.core_type<tc>} {
    %c0 = arith.constant 0 : index
    %c0_0 = arith.constant 0 : index
    %0 = vector.load %arg1[%c0, %c0_0] : memref<256x512xf32, #tpu.memory_space<vmem>>, vector<256x512xf32>
    %1 = arith.mulf %0, %0 : vector<256x512xf32>
    %cst = arith.constant dense<0.000000e+00> : vector<256xf32>
    %2 = vector.multi_reduction <add>, %1, %cst [1] : vector<256x512xf32> to vector<256xf32>
    %3 = vector.shape_cast %2 : vector<256xf32> to vector<256x1xf32>
    %cst_1 = arith.constant 1.000000e-24 : f32
    %4 = vector.broadcast %cst_1 : f32 to vector<256x1xf32>
    %5 = arith.maximumf %3, %4 : vector<256x1xf32>
    %6 = math.rsqrt %5 : vector<256x1xf32>
    %7 = vector.broadcast %6 : vector<256x1xf32> to vector<256x512xf32>
    %8 = arith.mulf %0, %7 : vector<256x512xf32>
    %9 = tpu.transpose %8, [1, 0] : vector<256x512xf32> -> vector<512x256xf32>
    %10 = arith.truncf %9 : vector<512x256xf32> to vector<512x256xbf16>
    %c0_2 = arith.constant 0 : index
    %c0_3 = arith.constant 0 : index
    %11 = vector.load %arg2[%c0_2, %c0_3] : memref<512x256xbf16, #tpu.memory_space<vmem>>, vector<512x256xbf16>
    tpu.vector_store %arg2[%c0_2, %c0_3], %10 {strides = array<i32>} : memref<512x256xbf16, #tpu.memory_space<vmem>>, vector<512x256xbf16>,
    %cst_4 = arith.constant dense<0.000000e+00> : vector<256x256xf32>
    %12 = tpu.matmul %8, %8, %cst_4 {dimension_numbers = #tpu.dot_dimension_numbers<[1], [1], [0], [0], [0, 0, 1, 0], [], []>} : vector<256x512xf32>, vector<256x512xf32>, vector<256x256xf32> -> vector<256x256xf32>
    %cst_5 = arith.constant 2.000000e+00 : f32
    %13 = vector.broadcast %cst_5 : f32 to vector<256x256xf32>
    %14 = arith.mulf %13, %12 : vector<256x256xf32>
    %cst_6 = arith.constant 2.000000e+00 : f32
    %15 = vector.broadcast %cst_6 : f32 to vector<256x256xf32>
    %16 = arith.subf %15, %14 : vector<256x256xf32>
    %cst_7 = arith.constant 0.000000e+00 : f32
    %17 = vector.broadcast %cst_7 : f32 to vector<256x256xf32>
    %18 = arith.maximumf %16, %17 : vector<256x256xf32>
    %19 = tpu.iota {dimensions = array<i32: 0>} : vector<256x256xi32>
    %20 = tpu.iota {dimensions = array<i32: 1>} : vector<256x256xi32>
    %21 = arith.cmpi eq, %19, %20 : vector<256x256xi32>
    %cst_8 = arith.constant 1.000000e+03 : f32
    %22 = vector.broadcast %cst_8 : f32 to vector<256x256xf32>
    %23 = arith.select %21, %22, %18 : vector<256x256xi1>, vector<256x256xf32>
    %cst_9 = arith.constant dense<0x7F800000> : vector<256xf32>
    %24 = vector.multi_reduction <minimumf>, %23, %cst_9 [0] : vector<256x256xf32> to vector<256xf32>
    %25 = vector.shape_cast %24 : vector<256xf32> to vector<1x256xf32>
    %26 = tpu.iota {dimensions = array<i32: 1>} : vector<16x256xi32>
    %c0_10 = arith.constant 0 : index
    %c0_11 = arith.constant 0 : index
    %27 = vector.load %arg0[%c0_10, %c0_11] : memref<16x1xi32, #tpu.memory_space<vmem>>, vector<16x1xi32>
    %28 = vector.broadcast %27 : vector<16x1xi32> to vector<16x256xi32>
    %29 = arith.cmpi eq, %26, %28 : vector<16x256xi32>
    %30 = arith.extui %29 : vector<16x256xi1> to vector<16x256xi32>
    %31 = arith.sitofp %30 : vector<16x256xi32> to vector<16x256xf32>
    %32 = vector.broadcast %25 : vector<1x256xf32> to vector<16x256xf32>
    %33 = arith.mulf %31, %32 : vector<16x256xf32>
    %34 = vector.shape_cast %33 : vector<16x256xf32> to vector<1x16x256xf32>
    %cst_12 = arith.constant dense<0.000000e+00> : vector<1xf32>
    %35 = vector.multi_reduction <add>, %34, %cst_12 [1, 2] : vector<1x16x256xf32> to vector<1xf32>
    %36 = vector.shape_cast %35 : vector<1xf32> to vector<1x1x1xf32>
    %37 = vector.extract %36[0, 0, 0] : f32 from vector<1x1x1xf32>
    %cst_13 = arith.constant 1.600000e+01 : f32
    %38 = arith.divf %cst_13, %37 : f32
    %c0_14 = arith.constant 0 : index
    %c0_15 = arith.constant 0 : index
    %39 = memref.load %arg3[%c0_14, %c0_15] : memref<1x1xf32, #tpu.memory_space<smem>>
    memref.store %38, %arg3[%c0_14, %c0_15] : memref<1x1xf32, #tpu.memory_space<smem>>
    return
  }
}

</mosaic_0001>

<llo_original>
// kernel: tpu_custom_call.1
$region0: #{tpu_custom_call.1}
  #allocation0 [shape = 'u32[]', space=smem, size = 0x4, offset = 0x4, fixed_abs, tag = 'smem constant byte address 0x4 - core index']
  #allocation1 [shape = 'u32[72,128]{1,0:T(1,128)}', space=vmem, size = 0x9000, scoped, tag = 'internal scratch']
  %s0 = inlined_call_operand.vmem [shape: s32[16,1], index: 0, kind: input, shape index: {}]
  %s1 = inlined_call_operand.hbm [shape: f32[256,512], index: 1, kind: input, shape index: {}]
  %s2 = inlined_call_operand.hbm [shape: bf16[512,256], index: 2, kind: output, shape index: {0}]
  %s3 = inlined_call_operand.hbm [shape: f32[1,1], index: 3, kind: output, shape index: {1}]
  %4 = xla_tuple %s2, %s3
  %s5 = sld [smem:[#allocation0]]
  $region30: #{tpu_custom_call.1} parent=0
    _
  %s7 = ssub.s32 1, %s5
  %s8 = scalar_select 0, %s7, %s5
  $region1: #{tpu_custom_call.1} parent=0
    #allocation2 [shape = 'u8[524288]{0}', space=vmem, size = 0x80000, scoped, tag = 'input window, operand 1, single buffered']
    #allocation3 [shape = 's32[1]{0}', space=sflag, size = 0x4, scoped, tag = 'scoped memory for tpu_custom_call.1']
    #allocation4 [shape = 's32[1]{0}', space=sflag, size = 0x4, scoped, tag = 'scoped memory for tpu_custom_call.1']
    #allocation5 [shape = 's32[1]{0}', space=sflag, size = 0x4, scoped, tag = 'scoped memory for tpu_custom_call.1']
    #allocation6 [shape = 'u8[262144]{0}', space=vmem, size = 0x40000, scoped, tag = 'output window, operand 0, single buffered']
    #allocation7 [shape = 'u8[512]{0}', space=smem, size = 0x200, scoped, tag = 'output window, operand 1, single buffered']
    %9 = vsyncpa [#allocation3], 0
    %10 = vsyncpa [#allocation4], 0
    %11 = vsyncpa [#allocation5], 0
    // Predicated region
    $region2: #{tpu_custom_call.1} parent=1 // pred_check
      _
    $region3: #{tpu_custom_call.1} parent=1 // pred_check_branch
      %13 = sbr.rel (0) target = $region5
    $region4: #{tpu_custom_call.1} parent=1 // pred_region
      _
    $region5: #{tpu_custom_call.1} parent=1 // pred_fallthru
      _
    // Predicated region
    $region6: #{tpu_custom_call.1} parent=1 // pred_check
      _
    $region7: #{tpu_custom_call.1} parent=1 // pred_check_branch
      %15 = sbr.rel (0) target = $region9
    $region8: #{tpu_custom_call.1} parent=1 // pred_region
      %17 = vsyncadd [#allocation3], 0
      %s18 = sshll.u32 %s1, 4
      %s19 = int_to_ptr.hbm [resolvable:$true] %s18
      %s20 = sshll.u32 [#allocation2], 4
      %s21 = int_to_ptr.vmem [resolvable:$true] %s20
      %26 = dma.hbm_to_vmem [thread:$0]  %s19, 16384, %s21, [#allocation3], 512, 512, 32
    $region9: #{tpu_custom_call.1} parent=1 // pred_fallthru
      _
    // Predicated region
    $region10: #{tpu_custom_call.1} parent=1 // pred_check
      _
    $region11: #{tpu_custom_call.1} parent=1 // pred_check_branch
      %28 = sbr.rel (0) target = $region13
    $region12: #{tpu_custom_call.1} parent=1 // pred_region
      %30 = dma.done [#allocation3], 16384
    $region13: #{tpu_custom_call.1} parent=1 // pred_fallthru
      _
    %v31 = vld [vmem:[#allocation2] sm:$0xff]
    %v32 = vld [vmem:[#allocation2 + $0x8] sm:$0xff]
    %v33 = vld [vmem:[#allocation2 + $0x10] sm:$0xff]
    %v34 = vld [vmem:[#allocation2 + $0x18] sm:$0xff]
    %v35 = vld [vmem:[#allocation2 + $0x20] sm:$0xff]
    %v36 = vld [vmem:[#allocation2 + $0x28] sm:$0xff]
    %v37 = vld [vmem:[#allocation2 + $0x30] sm:$0xff]
    %v38 = vld [vmem:[#allocation2 + $0x38] sm:$0xff]
    %v39 = vld [vmem:[#allocation2 + $0x40] sm:$0xff]
    %v40 = vld [vmem:[#allocation2 + $0x48] sm:$0xff]
    %v41 = vld [vmem:[#allocation2 + $0x50] sm:$0xff]
    %v42 = vld [vmem:[#allocation2 + $0x58] sm:$0xff]
    %v43 = vld [vmem:[#allocation2 + $0x60] sm:$0xff]
    %v44 = vld [vmem:[#allocation2 + $0x68] sm:$0xff]
    %v45 = vld [vmem:[#allocation2 + $0x70] sm:$0xff]
    %v46 = vld [vmem:[#allocation2 + $0x78] sm:$0xff]
    %v47 = vld [vmem:[#allocation2 + $0x80] sm:$0xff]
    %v48 = vld [vmem:[#allocation2 + $0x88] sm:$0xff]
    %v49 = vld [vmem:[#allocation2 + $0x90] sm:$0xff]
    %v50 = vld [vmem:[#allocation2 + $0x98] sm:$0xff]
    %v51 = vld [vmem:[#allocation2 + $0xa0] sm:$0xff]
    %v52 = vld [vmem:[#allocation2 + $0xa8] sm:$0xff]
    %v53 = vld [vmem:[#allocation2 + $0xb0] sm:$0xff]
    %v54 = vld [vmem:[#allocation2 + $0xb8] sm:$0xff]
    %v55 = vld [vmem:[#allocation2 + $0xc0] sm:$0xff]
    %v56 = vld [vmem:[#allocation2 + $0xc8] sm:$0xff]
    %v57 = vld [vmem:[#allocation2 + $0xd0] sm:$0xff]
    %v58 = vld [vmem:[#allocation2 + $0xd8] sm:$0xff]
    %v59 = vld [vmem:[#allocation2 + $0xe0] sm:$0xff]
    %v60 = vld [vmem:[#allocation2 + $0xe8] sm:$0xff]
    %v61 = vld [vmem:[#allocation2 + $0xf0] sm:$0xff]
    %v62 = vld [vmem:[#allocation2 + $0xf8] sm:$0xff]
    %v63 = vld [vmem:[#allocation2 + $0x100] sm:$0xff]
    %v64 = vld [vmem:[#allocation2 + $0x108] sm:$0xff]
    %v65 = vld [vmem:[#allocation2 + $0x110] sm:$0xff]
    %v66 = vld [vmem:[#allocation2 + $0x118] sm:$0xff]
    %v67 = vld [vmem:[#allocation2 + $0x120] sm:$0xff]
    %v68 = vld [vmem:[#allocation2 + $0x128] sm:$0xff]
    %v69 = vld [vmem:[#allocation2 + $0x130] sm:$0xff]
    %v70 = vld [vmem:[#allocation2 + $0x138] sm:$0xff]
    %v71 = vld [vmem:[#allocation2 + $0x140] sm:$0xff]
    %v72 = vld [vmem:[#allocation2 + $0x148] sm:$0xff]
    %v73 = vld [vmem:[#allocation2 + $0x150] sm:$0xff]
    %v74 = vld [vmem:[#allocation2 + $0x158] sm:$0xff]
    %v75 = vld [vmem:[#allocation2 + $0x160] sm:$0xff]
    %v76 = vld [vmem:[#allocation2 + $0x168] sm:$0xff]
    %v77 = vld [vmem:[#allocation2 + $0x170] sm:$0xff]
    %v78 = vld [vmem:[#allocation2 + $0x178] sm:$0xff]
    %v79 = vld [vmem:[#allocation2 + $0x180] sm:$0xff]
    %v80 = vld [vmem:[#allocation2 + $0x188] sm:$0xff]
    %v81 = vld [vmem:[#allocation2 + $0x190] sm:$0xff]
    %v82 = vld [vmem:[#allocation2 + $0x198] sm:$0xff]
    %v83 = vld [vmem:[#allocation2 + $0x1a0] sm:$0xff]
    %v84 = vld [vmem:[#allocation2 + $0x1a8] sm:$0xff]
    %v85 = vld [vmem:[#allocation2 + $0x1b0] sm:$0xff]
    %v86 = vld [vmem:[#allocation2 + $0x1b8] sm:$0xff]
    %v87 = vld [vmem:[#allocation2 + $0x1c0] sm:$0xff]
    %v88 = vld [vmem:[#allocation2 + $0x1c8] sm:$0xff]
    %v89 = vld [vmem:[#allocation2 + $0x1d0] sm:$0xff]
    %v90 = vld [vmem:[#allocation2 + $0x1d8] sm:$0xff]
    %v91 = vld [vmem:[#allocation2 + $0x1e0] sm:$0xff]
    %v92 = vld [vmem:[#allocation2 + $0x1e8] sm:$0xff]
    %v93 = vld [vmem:[#allocation2 + $0x1f0] sm:$0xff]
    %v94 = vld [vmem:[#allocation2 + $0x1f8] sm:$0xff]
    %v95 = vld [vmem:[#allocation2 + $0x200] sm:$0xff]
    %v96 = vld [vmem:[#allocation2 + $0x208] sm:$0xff]
    %v97 = vld [vmem:[#allocation2 + $0x210] sm:$0xff]
    %v98 = vld [vmem:[#allocation2 + $0x218] sm:$0xff]
    %v99 = vld [vmem:[#allocation2 + $0x220] sm:$0xff]
    %v100 = vld [vmem:[#allocation2 + $0x228] sm:$0xff]
    %v101 = vld [vmem:[#allocation2 + $0x230] sm:$0xff]
    %v102 = vld [vmem:[#allocation2 + $0x238] sm:$0xff]
    %v103 = vld [vmem:[#allocation2 + $0x240] sm:$0xff]
    %v104 = vld [vmem:[#allocation2 + $0x248] sm:$0xff]
    %v105 = vld [vmem:[#allocation2 + $0x250] sm:$0xff]
    %v106 = vld [vmem:[#allocation2 + $0x258] sm:$0xff]
    %v107 = vld [vmem:[#allocation2 + $0x260] sm:$0xff]
    %v108 = vld [vmem:[#allocation2 + $0x268] sm:$0xff]
    %v109 = vld [vmem:[#allocation2 + $0x270] sm:$0xff]
    %v110 = vld [vmem:[#allocation2 + $0x278] sm:$0xff]
    %v111 = vld [vmem:[#allocation2 + $0x280] sm:$0xff]
    %v112 = vld [vmem:[#allocation2 + $0x288] sm:$0xff]
    %v113 = vld [vmem:[#allocation2 + $0x290] sm:$0xff]
    %v114 = vld [vmem:[#allocation2 + $0x298] sm:$0xff]
    %v115 = vld [vmem:[#allocation2 + $0x2a0] sm:$0xff]
    %v116 = vld [vmem:[#allocation2 + $0x2a8] sm:$0xff]
    %v117 = vld [vmem:[#allocation2 + $0x2b0] sm:$0xff]
    %v118 = vld [vmem:[#allocation2 + $0x2b8] sm:$0xff]
    %v119 = vld [vmem:[#allocation2 + $0x2c0] sm:$0xff]
    %v120 = vld [vmem:[#allocation2 + $0x2c8] sm:$0xff]
    %v121 = vld [vmem:[#allocation2 + $0x2d0] sm:$0xff]
    %v122 = vld [vmem:[#allocation2 + $0x2d8] sm:$0xff]
    %v123 = vld [vmem:[#allocation2 + $0x2e0] sm:$0xff]
    %v124 = vld [vmem:[#allocation2 + $0x2e8] sm:$0xff]
    %v125 = vld [vmem:[#allocation2 + $0x2f0] sm:$0xff]
    %v126 = vld [vmem:[#allocation2 + $0x2f8] sm:$0xff]
    %v127 = vld [vmem:[#allocation2 + $0x300] sm:$0xff]
    %v128 = vld [vmem:[#allocation2 + $0x308] sm:$0xff]
    %v129 = vld [vmem:[#allocation2 + $0x310] sm:$0xff]
    %v130 = vld [vmem:[#allocation2 + $0x318] sm:$0xff]
    %v131 = vld [vmem:[#allocation2 + $0x320] sm:$0xff]
    %v132 = vld [vmem:[#allocation2 + $0x328] sm:$0xff]
    %v133 = vld [vmem:[#allocation2 + $0x330] sm:$0xff]
    %v134 = vld [vmem:[#allocation2 + $0x338] sm:$0xff]
    %v135 = vld [vmem:[#allocation2 + $0x340] sm:$0xff]
    %v136 = vld [vmem:[#allocation2 + $0x348] sm:$0xff]
    %v137 = vld [vmem:[#allocation2 + $0x350] sm:$0xff]
    %v138 = vld [vmem:[#allocation2 + $0x358] sm:$0xff]
    %v139 = vld [vmem:[#allocation2 + $0x360] sm:$0xff]
    %v140 = vld [vmem:[#allocation2 + $0x368] sm:$0xff]
    %v141 = vld [vmem:[#allocation2 + $0x370] sm:$0xff]
    %v142 = vld [vmem:[#allocation2 + $0x378] sm:$0xff]
    %v143 = vld [vmem:[#allocation2 + $0x380] sm:$0xff]
    %v144 = vld [vmem:[#allocation2 + $0x388] sm:$0xff]
    %v145 = vld [vmem:[#allocation2 + $0x390] sm:$0xff]
    %v146 = vld [vmem:[#allocation2 + $0x398] sm:$0xff]
    %v147 = vld [vmem:[#allocation2 + $0x3a0] sm:$0xff]
    %v148 = vld [vmem:[#allocation2 + $0x3a8] sm:$0xff]
    %v149 = vld [vmem:[#allocation2 + $0x3b0] sm:$0xff]
    %v150 = vld [vmem:[#allocation2 + $0x3b8] sm:$0xff]
    %v151 = vld [vmem:[#allocation2 + $0x3c0] sm:$0xff]
    %v152 = vld [vmem:[#allocation2 + $0x3c8] sm:$0xff]
    %v153 = vld [vmem:[#allocation2 + $0x3d0] sm:$0xff]
    %v154 = vld [vmem:[#allocation2 + $0x3d8] sm:$0xff]
    %v155 = vld [vmem:[#allocation2 + $0x3e0] sm:$0xff]
    %v156 = vld [vmem:[#allocation2 + $0x3e8] sm:$0xff]
    %v157 = vld [vmem:[#allocation2 + $0x3f0] sm:$0xff]
    %v158 = vld [vmem:[#allocation2 + $0x3f8] sm:$0xff]
    %v159 = vmul.f32 %v31, %v31
    %v160 = vmul.f32 %v32, %v32
    %v161 = vmul.f32 %v33, %v33
    %v162 = vmul.f32 %v34, %v34
    %v163 = vmul.f32 %v35, %v35
    %v164 = vmul.f32 %v36, %v36
    %v165 = vmul.f32 %v37, %v37
    %v166 = vmul.f32 %v38, %v38
    %v167 = vmul.f32 %v39, %v39
    %v168 = vmul.f32 %v40, %v40
    %v169 = vmul.f32 %v41, %v41
    %v170 = vmul.f32 %v42, %v42
    %v171 = vmul.f32 %v43, %v43
    %v172 = vmul.f32 %v44, %v44
    %v173 = vmul.f32 %v45, %v45
    %v174 = vmul.f32 %v46, %v46
    %v175 = vmul.f32 %v47, %v47
    %v176 = vmul.f32 %v48, %v48
    %v177 = vmul.f32 %v49, %v49
    %v178 = vmul.f32 %v50, %v50
    %v179 = vmul.f32 %v51, %v51
    %v180 = vmul.f32 %v52, %v52
    %v181 = vmul.f32 %v53, %v53
    %v182 = vmul.f32 %v54, %v54
    %v183 = vmul.f32 %v55, %v55
    %v184 = vmul.f32 %v56, %v56
    %v185 = vmul.f32 %v57, %v57
    %v186 = vmul.f32 %v58, %v58
    %v187 = vmul.f32 %v59, %v59
    %v188 = vmul.f32 %v60, %v60
    %v189 = vmul.f32 %v61, %v61
    %v190 = vmul.f32 %v62, %v62
    %v191 = vmul.f32 %v63, %v63
    %v192 = vmul.f32 %v64, %v64
    %v193 = vmul.f32 %v65, %v65
    %v194 = vmul.f32 %v66, %v66
    %v195 = vmul.f32 %v67, %v67
    %v196 = vmul.f32 %v68, %v68
    %v197 = vmul.f32 %v69, %v69
    %v198 = vmul.f32 %v70, %v70
    %v199 = vmul.f32 %v71, %v71
    %v200 = vmul.f32 %v72, %v72
    %v201 = vmul.f32 %v73, %v73
    %v202 = vmul.f32 %v74, %v74
    %v203 = vmul.f32 %v75, %v75
    %v204 = vmul.f32 %v76, %v76
    %v205 = vmul.f32 %v77, %v77
    %v206 = vmul.f32 %v78, %v78
    %v207 = vmul.f32 %v79, %v79
    %v208 = vmul.f32 %v80, %v80
    %v209 = vmul.f32 %v81, %v81
    %v210 = vmul.f32 %v82, %v82
    %v211 = vmul.f32 %v83, %v83
    %v212 = vmul.f32 %v84, %v84
    %v213 = vmul.f32 %v85, %v85
    %v214 = vmul.f32 %v86, %v86
    %v215 = vmul.f32 %v87, %v87
    %v216 = vmul.f32 %v88, %v88
    %v217 = vmul.f32 %v89, %v89
    %v218 = vmul.f32 %v90, %v90
    %v219 = vmul.f32 %v91, %v91
    %v220 = vmul.f32 %v92, %v92
    %v221 = vmul.f32 %v93, %v93
    %v222 = vmul.f32 %v94, %v94
    %v223 = vmul.f32 %v95, %v95
    %v224 = vmul.f32 %v96, %v96
    %v225 = vmul.f32 %v97, %v97
    %v226 = vmul.f32 %v98, %v98
    %v227 = vmul.f32 %v99, %v99
    %v228 = vmul.f32 %v100, %v100
    %v229 = vmul.f32 %v101, %v101
    %v230 = vmul.f32 %v102, %v102
    %v231 = vmul.f32 %v103, %v103
    %v232 = vmul.f32 %v104, %v104
    %v233 = vmul.f32 %v105, %v105
    %v234 = vmul.f32 %v106, %v106
    %v235 = vmul.f32 %v107, %v107
    %v236 = vmul.f32 %v108, %v108
    %v237 = vmul.f32 %v109, %v109
    %v238 = vmul.f32 %v110, %v110
    %v239 = vmul.f32 %v111, %v111
    %v240 = vmul.f32 %v112, %v112
    %v241 = vmul.f32 %v113, %v113
    %v242 = vmul.f32 %v114, %v114
    %v243 = vmul.f32 %v115, %v115
    %v244 = vmul.f32 %v116, %v116
    %v245 = vmul.f32 %v117, %v117
    %v246 = vmul.f32 %v118, %v118
    %v247 = vmul.f32 %v119, %v119
    %v248 = vmul.f32 %v120, %v120
    %v249 = vmul.f32 %v121, %v121
    %v250 = vmul.f32 %v122, %v122
    %v251 = vmul.f32 %v123, %v123
    %v252 = vmul.f32 %v124, %v124
    %v253 = vmul.f32 %v125, %v125
    %v254 = vmul.f32 %v126, %v126
    %v255 = vmul.f32 %v127, %v127
    %v256 = vmul.f32 %v128, %v128
    %v257 = vmul.f32 %v129, %v129
    %v258 = vmul.f32 %v130, %v130
    %v259 = vmul.f32 %v131, %v131
    %v260 = vmul.f32 %v132, %v132
    %v261 = vmul.f32 %v133, %v133
    %v262 = vmul.f32 %v134, %v134
    %v263 = vmul.f32 %v135, %v135
    %v264 = vmul.f32 %v136, %v136
    %v265 = vmul.f32 %v137, %v137
    %v266 = vmul.f32 %v138, %v138
    %v267 = vmul.f32 %v139, %v139
    %v268 = vmul.f32 %v140, %v140
    %v269 = vmul.f32 %v141, %v141
    %v270 = vmul.f32 %v142, %v142
    %v271 = vmul.f32 %v143, %v143
    %v272 = vmul.f32 %v144, %v144
    %v273 = vmul.f32 %v145, %v145
    %v274 = vmul.f32 %v146, %v146
    %v275 = vmul.f32 %v147, %v147
    %v276 = vmul.f32 %v148, %v148
    %v277 = vmul.f32 %v149, %v149
    %v278 = vmul.f32 %v150, %v150
    %v279 = vmul.f32 %v151, %v151
    %v280 = vmul.f32 %v152, %v152
    %v281 = vmul.f32 %v153, %v153
    %v282 = vmul.f32 %v154, %v154
    %v283 = vmul.f32 %v155, %v155
    %v284 = vmul.f32 %v156, %v156
    %v285 = vmul.f32 %v157, %v157
    %v286 = vmul.f32 %v158, %v158
    %v287 = vadd.f32 %v159, %v160
    %v288 = vadd.f32 %v287, %v161
    %v289 = vadd.f32 %v288, %v162
    %290 = vadd.xlane.f32.xlu0 %v289
    %v291 = vpop.xlane.xlu0 %290
    %v292 = vadd.f32 %v163, %v164
    %v293 = vadd.f32 %v292, %v165
    %v294 = vadd.f32 %v293, %v166
    %295 = vadd.xlane.f32.xlu0 %v294
    %v296 = vpop.xlane.xlu0 %295
    %v297 = vadd.f32 %v167, %v168
    %v298 = vadd.f32 %v297, %v169
    %v299 = vadd.f32 %v298, %v170
    %300 = vadd.xlane.f32.xlu0 %v299
    %v301 = vpop.xlane.xlu0 %300
    %v302 = vadd.f32 %v171, %v172
    %v303 = vadd.f32 %v302, %v173
    %v304 = vadd.f32 %v303, %v174
    %305 = vadd.xlane.f32.xlu0 %v304
    %v306 = vpop.xlane.xlu0 %305
    %v307 = vadd.f32 %v175, %v176
    %v308 = vadd.f32 %v307, %v177
    %v309 = vadd.f32 %v308, %v178
    %310 = vadd.xlane.f32.xlu0 %v309
    %v311 = vpop.xlane.xlu0 %310
    %v312 = vadd.f32 %v179, %v180
    %v313 = vadd.f32 %v312, %v181
    %v314 = vadd.f32 %v313, %v182
    %315 = vadd.xlane.f32.xlu0 %v314
    %v316 = vpop.xlane.xlu0 %315
    %v317 = vadd.f32 %v183, %v184
    %v318 = vadd.f32 %v317, %v185
    %v319 = vadd.f32 %v318, %v186
    %320 = vadd.xlane.f32.xlu0 %v319
    %v321 = vpop.xlane.xlu0 %320
    %v322 = vadd.f32 %v187, %v188
    %v323 = vadd.f32 %v322, %v189
    %v324 = vadd.f32 %v323, %v190
    %325 = vadd.xlane.f32.xlu0 %v324
    %v326 = vpop.xlane.xlu0 %325
    %v327 = vadd.f32 %v191, %v192
    %v328 = vadd.f32 %v327, %v193
    %v329 = vadd.f32 %v328, %v194
    %330 = vadd.xlane.f32.xlu0 %v329
    %v331 = vpop.xlane.xlu0 %330
    %v332 = vadd.f32 %v195, %v196
    %v333 = vadd.f32 %v332, %v197
    %v334 = vadd.f32 %v333, %v198
    %335 = vadd.xlane.f32.xlu0 %v334
    %v336 = vpop.xlane.xlu0 %335
    %v337 = vadd.f32 %v199, %v200
    %v338 = vadd.f32 %v337, %v201
    %v339 = vadd.f32 %v338, %v202
    %340 = vadd.xlane.f32.xlu0 %v339
    %v341 = vpop.xlane.xlu0 %340
    %v342 = vadd.f32 %v203, %v204
    %v343 = vadd.f32 %v342, %v205
    %v344 = vadd.f32 %v343, %v206
    %345 = vadd.xlane.f32.xlu0 %v344
    %v346 = vpop.xlane.xlu0 %345
    %v347 = vadd.f32 %v207, %v208
    %v348 = vadd.f32 %v347, %v209
    %v349 = vadd.f32 %v348, %v210
    %350 = vadd.xlane.f32.xlu0 %v349
    %v351 = vpop.xlane.xlu0 %350
    %v352 = vadd.f32 %v211, %v212
    %v353 = vadd.f32 %v352, %v213
    %v354 = vadd.f32 %v353, %v214
    %355 = vadd.xlane.f32.xlu0 %v354
    %v356 = vpop.xlane.xlu0 %355
    %v357 = vadd.f32 %v215, %v216
    %v358 = vadd.f32 %v357, %v217
    %v359 = vadd.f32 %v358, %v218
    %360 = vadd.xlane.f32.xlu0 %v359
    %v361 = vpop.xlane.xlu0 %360
    %v362 = vadd.f32 %v219, %v220
    %v363 = vadd.f32 %v362, %v221
    %v364 = vadd.f32 %v363, %v222
    %365 = vadd.xlane.f32.xlu0 %v364
    %v366 = vpop.xlane.xlu0 %365
    %v367 = vadd.f32 %v223, %v224
    %v368 = vadd.f32 %v367, %v225
    %v369 = vadd.f32 %v368, %v226
    %370 = vadd.xlane.f32.xlu0 %v369
    %v371 = vpop.xlane.xlu0 %370
    %v372 = vadd.f32 %v227, %v228
    %v373 = vadd.f32 %v372, %v229
    %v374 = vadd.f32 %v373, %v230
    %375 = vadd.xlane.f32.xlu0 %v374
    %v376 = vpop.xlane.xlu0 %375
    %v377 = vadd.f32 %v231, %v232
    %v378 = vadd.f32 %v377, %v233
    %v379 = vadd.f32 %v378, %v234
    %380 = vadd.xlane.f32.xlu0 %v379
    %v381 = vpop.xlane.xlu0 %380
    %v382 = vadd.f32 %v235, %v236
    %v383 = vadd.f32 %v382, %v237
    %v384 = vadd.f32 %v383, %v238
    %385 = vadd.xlane.f32.xlu0 %v384
    %v386 = vpop.xlane.xlu0 %385
    %v387 = vadd.f32 %v239, %v240
    %v388 = vadd.f32 %v387, %v241
    %v389 = vadd.f32 %v388, %v242
    %390 = vadd.xlane.f32.xlu0 %v389
    %v391 = vpop.xlane.xlu0 %390
    %v392 = vadd.f32 %v243, %v244
    %v393 = vadd.f32 %v392, %v245
    %v394 = vadd.f32 %v393, %v246
    %395 = vadd.xlane.f32.xlu0 %v394
    %v396 = vpop.xlane.xlu0 %395
    %v397 = vadd.f32 %v247, %v248
    %v398 = vadd.f32 %v397, %v249
    %v399 = vadd.f32 %v398, %v250
    %400 = vadd.xlane.f32.xlu0 %v399
    %v401 = vpop.xlane.xlu0 %400
    %v402 = vadd.f32 %v251, %v252
    %v403 = vadd.f32 %v402, %v253
    %v404 = vadd.f32 %v403, %v254
    %405 = vadd.xlane.f32.xlu0 %v404
    %v406 = vpop.xlane.xlu0 %405
    %v407 = vadd.f32 %v255, %v256
    %v408 = vadd.f32 %v407, %v257
    %v409 = vadd.f32 %v408, %v258
    %410 = vadd.xlane.f32.xlu0 %v409
    %v411 = vpop.xlane.xlu0 %410
    %v412 = vadd.f32 %v259, %v260
    %v413 = vadd.f32 %v412, %v261
    %v414 = vadd.f32 %v413, %v262
    %415 = vadd.xlane.f32.xlu0 %v414
    %v416 = vpop.xlane.xlu0 %415
    %v417 = vadd.f32 %v263, %v264
    %v418 = vadd.f32 %v417, %v265
    %v419 = vadd.f32 %v418, %v266
    %420 = vadd.xlane.f32.xlu0 %v419
    %v421 = vpop.xlane.xlu0 %420
    %v422 = vadd.f32 %v267, %v268
    %v423 = vadd.f32 %v422, %v269
    %v424 = vadd.f32 %v423, %v270
    %425 = vadd.xlane.f32.xlu0 %v424
    %v426 = vpop.xlane.xlu0 %425
    %v427 = vadd.f32 %v271, %v272
    %v428 = vadd.f32 %v427, %v273
    %v429 = vadd.f32 %v428, %v274
    %430 = vadd.xlane.f32.xlu0 %v429
    %v431 = vpop.xlane.xlu0 %430
    %v432 = vadd.f32 %v275, %v276
    %v433 = vadd.f32 %v432, %v277
    %v434 = vadd.f32 %v433, %v278
    %435 = vadd.xlane.f32.xlu0 %v434
    %v436 = vpop.xlane.xlu0 %435
    %v437 = vadd.f32 %v279, %v280
    %v438 = vadd.f32 %v437, %v281
    %v439 = vadd.f32 %v438, %v282
    %440 = vadd.xlane.f32.xlu0 %v439
    %v441 = vpop.xlane.xlu0 %440
    %v442 = vadd.f32 %v283, %v284
    %v443 = vadd.f32 %v442, %v285
    %v444 = vadd.f32 %v443, %v286
    %445 = vadd.xlane.f32.xlu0 %v444
    %v446 = vpop.xlane.xlu0 %445
    %v447 = vmax.f32 %v291, 1e-24
    %v448 = vmax.f32 %v296, 1e-24
    %v449 = vmax.f32 %v301, 1e-24
    %v450 = vmax.f32 %v306, 1e-24
    %v451 = vmax.f32 %v311, 1e-24
    %v452 = vmax.f32 %v316, 1e-24
    %v453 = vmax.f32 %v321, 1e-24
    %v454 = vmax.f32 %v326, 1e-24
    %v455 = vmax.f32 %v331, 1e-24
    %v456 = vmax.f32 %v336, 1e-24
    %v457 = vmax.f32 %v341, 1e-24
    %v458 = vmax.f32 %v346, 1e-24
    %v459 = vmax.f32 %v351, 1e-24
    %v460 = vmax.f32 %v356, 1e-24
    %v461 = vmax.f32 %v361, 1e-24
    %v462 = vmax.f32 %v366, 1e-24
    %v463 = vmax.f32 %v371, 1e-24
    %v464 = vmax.f32 %v376, 1e-24
    %v465 = vmax.f32 %v381, 1e-24
    %v466 = vmax.f32 %v386, 1e-24
    %v467 = vmax.f32 %v391, 1e-24
    %v468 = vmax.f32 %v396, 1e-24
    %v469 = vmax.f32 %v401, 1e-24
    %v470 = vmax.f32 %v406, 1e-24
    %v471 = vmax.f32 %v411, 1e-24
    %v472 = vmax.f32 %v416, 1e-24
    %v473 = vmax.f32 %v421, 1e-24
    %v474 = vmax.f32 %v426, 1e-24
    %v475 = vmax.f32 %v431, 1e-24
    %v476 = vmax.f32 %v436, 1e-24
    %v477 = vmax.f32 %v441, 1e-24
    %v478 = vmax.f32 %v446, 1e-24
    %v479 = vrsqrt.pop %v447
    %v480 = vmul.f32 %v479, %v447
    %v481 = vmul.f32 %v480, %v479
    %v482 = vmul.f32 0.5, %v481
    %v483 = vsub.f32 1.5, %v482
    %v484 = vmul.f32 %v479, %v483
    %vm485 = vweird.f32 %v447
    %vm486 = vweird.f32 %v479
    %vm487 = vmor %vm485, %vm486
    %v488 = vsel %vm487, %v479, %v484
    %v489 = vrsqrt.pop %v448
    %v490 = vmul.f32 %v489, %v448
    %v491 = vmul.f32 %v490, %v489
    %v492 = vmul.f32 0.5, %v491
    %v493 = vsub.f32 1.5, %v492
    %v494 = vmul.f32 %v489, %v493
    %vm495 = vweird.f32 %v448
    %vm496 = vweird.f32 %v489
    %vm497 = vmor %vm495, %vm496
    %v498 = vsel %vm497, %v489, %v494
    %v499 = vrsqrt.pop %v449
    %v500 = vmul.f32 %v499, %v449
    %v501 = vmul.f32 %v500, %v499
    %v502 = vmul.f32 0.5, %v501
    %v503 = vsub.f32 1.5, %v502
    %v504 = vmul.f32 %v499, %v503
    %vm505 = vweird.f32 %v449
    %vm506 = vweird.f32 %v499
    %vm507 = vmor %vm505, %vm506
    %v508 = vsel %vm507, %v499, %v504
    %v509 = vrsqrt.pop %v450
    %v510 = vmul.f32 %v509, %v450
    %v511 = vmul.f32 %v510, %v509
    %v512 = vmul.f32 0.5, %v511
    %v513 = vsub.f32 1.5, %v512
    %v514 = vmul.f32 %v509, %v513
    %vm515 = vweird.f32 %v450
    %vm516 = vweird.f32 %v509
    %vm517 = vmor %vm515, %vm516
    %v518 = vsel %vm517, %v509, %v514
    %v519 = vrsqrt.pop %v451
    %v520 = vmul.f32 %v519, %v451
    %v521 = vmul.f32 %v520, %v519
    %v522 = vmul.f32 0.5, %v521
    %v523 = vsub.f32 1.5, %v522
    %v524 = vmul.f32 %v519, %v523
    %vm525 = vweird.f32 %v451
    %vm526 = vweird.f32 %v519
    %vm527 = vmor %vm525, %vm526
    %v528 = vsel %vm527, %v519, %v524
    %v529 = vrsqrt.pop %v452
    %v530 = vmul.f32 %v529, %v452
    %v531 = vmul.f32 %v530, %v529
    %v532 = vmul.f32 0.5, %v531
    %v533 = vsub.f32 1.5, %v532
    %v534 = vmul.f32 %v529, %v533
    %vm535 = vweird.f32 %v452
    %vm536 = vweird.f32 %v529
    %vm537 = vmor %vm535, %vm536
    %v538 = vsel %vm537, %v529, %v534
    %v539 = vrsqrt.pop %v453
    %v540 = vmul.f32 %v539, %v453
    %v541 = vmul.f32 %v540, %v539
    %v542 = vmul.f32 0.5, %v541
    %v543 = vsub.f32 1.5, %v542
    %v544 = vmul.f32 %v539, %v543
    %vm545 = vweird.f32 %v453
    %vm546 = vweird.f32 %v539
    %vm547 = vmor %vm545, %vm546
    %v548 = vsel %vm547, %v539, %v544
    %v549 = vrsqrt.pop %v454
    %v550 = vmul.f32 %v549, %v454
    %v551 = vmul.f32 %v550, %v549
    %v552 = vmul.f32 0.5, %v551
    %v553 = vsub.f32 1.5, %v552
    %v554 = vmul.f32 %v549, %v553
    %vm555 = vweird.f32 %v454
    %vm556 = vweird.f32 %v549
    %vm557 = vmor %vm555, %vm556
    %v558 = vsel %vm557, %v549, %v554
    %v559 = vrsqrt.pop %v455
    %v560 = vmul.f32 %v559, %v455
    %v561 = vmul.f32 %v560, %v559
    %v562 = vmul.f32 0.5, %v561
    %v563 = vsub.f32 1.5, %v562
    %v564 = vmul.f32 %v559, %v563
    %vm565 = vweird.f32 %v455
    %vm566 = vweird.f32 %v559
    %vm567 = vmor %vm565, %vm566
    %v568 = vsel %vm567, %v559, %v564
    %v569 = vrsqrt.pop %v456
    %v570 = vmul.f32 %v569, %v456
    %v571 = vmul.f32 %v570, %v569
    %v572 = vmul.f32 0.5, %v571
    %v573 = vsub.f32 1.5, %v572
    %v574 = vmul.f32 %v569, %v573
    %vm575 = vweird.f32 %v456
    %vm576 = vweird.f32 %v569
    %vm577 = vmor %vm575, %vm576
    %v578 = vsel %vm577, %v569, %v574
    %v579 = vrsqrt.pop %v457
    %v580 = vmul.f32 %v579, %v457
    %v581 = vmul.f32 %v580, %v579
    %v582 = vmul.f32 0.5, %v581
    %v583 = vsub.f32 1.5, %v582
    %v584 = vmul.f32 %v579, %v583
    %vm585 = vweird.f32 %v457
    %vm586 = vweird.f32 %v579
    %vm587 = vmor %vm585, %vm586
    %v588 = vsel %vm587, %v579, %v584
    %v589 = vrsqrt.pop %v458
    %v590 = vmul.f32 %v589, %v458
    %v591 = vmul.f32 %v590, %v589
    %v592 = vmul.f32 0.5, %v591
    %v593 = vsub.f32 1.5, %v592
    %v594 = vmul.f32 %v589, %v593
    %vm595 = vweird.f32 %v458
    %vm596 = vweird.f32 %v589
    %vm597 = vmor %vm595, %vm596
    %v598 = vsel %vm597, %v589, %v594
    %v599 = vrsqrt.pop %v459
    %v600 = vmul.f32 %v599, %v459
    %v601 = vmul.f32 %v600, %v599
    %v602 = vmul.f32 0.5, %v601
    %v603 = vsub.f32 1.5, %v602
    %v604 = vmul.f32 %v599, %v603
    %vm605 = vweird.f32 %v459
    %vm606 = vweird.f32 %v599
    %vm607 = vmor %vm605, %vm606
    %v608 = vsel %vm607, %v599, %v604
    %v609 = vrsqrt.pop %v460
    %v610 = vmul.f32 %v609, %v460
    %v611 = vmul.f32 %v610, %v609
    %v612 = vmul.f32 0.5, %v611
    %v613 = vsub.f32 1.5, %v612
    %v614 = vmul.f32 %v609, %v613
    %vm615 = vweird.f32 %v460
    %vm616 = vweird.f32 %v609
    %vm617 = vmor %vm615, %vm616
    %v618 = vsel %vm617, %v609, %v614
    %v619 = vrsqrt.pop %v461
    %v620 = vmul.f32 %v619, %v461
    %v621 = vmul.f32 %v620, %v619
    %v622 = vmul.f32 0.5, %v621
    %v623 = vsub.f32 1.5, %v622
    %v624 = vmul.f32 %v619, %v623
    %vm625 = vweird.f32 %v461
    %vm626 = vweird.f32 %v619
    %vm627 = vmor %vm625, %vm626
    %v628 = vsel %vm627, %v619, %v624
    %v629 = vrsqrt.pop %v462
    %v630 = vmul.f32 %v629, %v462
    %v631 = vmul.f32 %v630, %v629
    %v632 = vmul.f32 0.5, %v631
    %v633 = vsub.f32 1.5, %v632
    %v634 = vmul.f32 %v629, %v633
    %vm635 = vweird.f32 %v462
    %vm636 = vweird.f32 %v629
    %vm637 = vmor %vm635, %vm636
    %v638 = vsel %vm637, %v629, %v634
    %v639 = vrsqrt.pop %v463
    %v640 = vmul.f32 %v639, %v463
    %v641 = vmul.f32 %v640, %v639
    %v642 = vmul.f32 0.5, %v641
    %v643 = vsub.f32 1.5, %v642
    %v644 = vmul.f32 %v639, %v643
    %vm645 = vweird.f32 %v463
    %vm646 = vweird.f32 %v639
    %vm647 = vmor %vm645, %vm646
    %v648 = vsel %vm647, %v639, %v644
    %v649 = vrsqrt.pop %v464
    %v650 = vmul.f32 %v649, %v464
    %v651 = vmul.f32 %v650, %v649
    %v652 = vmul.f32 0.5, %v651
    %v653 = vsub.f32 1.5, %v652
    %v654 = vmul.f32 %v649, %v653
    %vm655 = vweird.f32 %v464
    %vm656 = vweird.f32 %v649
    %vm657 = vmor %vm655, %vm656
    %v658 = vsel %vm657, %v649, %v654
    %v659 = vrsqrt.pop %v465
    %v660 = vmul.f32 %v659, %v465
    %v661 = vmul.f32 %v660, %v659
    %v662 = vmul.f32 0.5, %v661
    %v663 = vsub.f32 1.5, %v662
    %v664 = vmul.f32 %v659, %v663
    %vm665 = vweird.f32 %v465
    %vm666 = vweird.f32 %v659
    %vm667 = vmor %vm665, %vm666
    %v668 = vsel %vm667, %v659, %v664
    %v669 = vrsqrt.pop %v466
    %v670 = vmul.f32 %v669, %v466
    %v671 = vmul.f32 %v670, %v669
    %v672 = vmul.f32 0.5, %v671
    %v673 = vsub.f32 1.5, %v672
    %v674 = vmul.f32 %v669, %v673
    %vm675 = vweird.f32 %v466
    %vm676 = vweird.f32 %v669
    %vm677 = vmor %vm675, %vm676
    %v678 = vsel %vm677, %v669, %v674
    %v679 = vrsqrt.pop %v467
    %v680 = vmul.f32 %v679, %v467
    %v681 = vmul.f32 %v680, %v679
    %v682 = vmul.f32 0.5, %v681
    %v683 = vsub.f32 1.5, %v682
    %v684 = vmul.f32 %v679, %v683
    %vm685 = vweird.f32 %v467
    %vm686 = vweird.f32 %v679
    %vm687 = vmor %vm685, %vm686
    %v688 = vsel %vm687, %v679, %v684
    %v689 = vrsqrt.pop %v468
    %v690 = vmul.f32 %v689, %v468
    %v691 = vmul.f32 %v690, %v689
    %v692 = vmul.f32 0.5, %v691
    %v693 = vsub.f32 1.5, %v692
    %v694 = vmul.f32 %v689, %v693
    %vm695 = vweird.f32 %v468
    %vm696 = vweird.f32 %v689
    %vm697 = vmor %vm695, %vm696
    %v698 = vsel %vm697, %v689, %v694
    %v699 = vrsqrt.pop %v469
    %v700 = vmul.f32 %v699, %v469
    %v701 = vmul.f32 %v700, %v699
    %v702 = vmul.f32 0.5, %v701
    %v703 = vsub.f32 1.5, %v702
    %v704 = vmul.f32 %v699, %v703
    %vm705 = vweird.f32 %v469
    %vm706 = vweird.f32 %v699
    %vm707 = vmor %vm705, %vm706
    %v708 = vsel %vm707, %v699, %v704
    %v709 = vrsqrt.pop %v470
    %v710 = vmul.f32 %v709, %v470
    %v711 = vmul.f32 %v710, %v709
    %v712 = vmul.f32 0.5, %v711
    %v713 = vsub.f32 1.5, %v712
    %v714 = vmul.f32 %v709, %v713
    %vm715 = vweird.f32 %v470
    %vm716 = vweird.f32 %v709
    %vm717 = vmor %vm715, %vm716
    %v718 = vsel %vm717, %v709, %v714
    %v719 = vrsqrt.pop %v471
    %v720 = vmul.f32 %v719, %v471
    %v721 = vmul.f32 %v720, %v719
    %v722 = vmul.f32 0.5, %v721
    %v723 = vsub.f32 1.5, %v722
    %v724 = vmul.f32 %v719, %v723
    %vm725 = vweird.f32 %v471
    %vm726 = vweird.f32 %v719
    %vm727 = vmor %vm725, %vm726
    %v728 = vsel %vm727, %v719, %v724
    %v729 = vrsqrt.pop %v472
    %v730 = vmul.f32 %v729, %v472
    %v731 = vmul.f32 %v730, %v729
    %v732 = vmul.f32 0.5, %v731
    %v733 = vsub.f32 1.5, %v732
    %v734 = vmul.f32 %v729, %v733
    %vm735 = vweird.f32 %v472
    %vm736 = vweird.f32 %v729
    %vm737 = vmor %vm735, %vm736
    %v738 = vsel %vm737, %v729, %v734
    %v739 = vrsqrt.pop %v473
    %v740 = vmul.f32 %v739, %v473
    %v741 = vmul.f32 %v740, %v739
    %v742 = vmul.f32 0.5, %v741
    %v743 = vsub.f32 1.5, %v742
    %v744 = vmul.f32 %v739, %v743
    %vm745 = vweird.f32 %v473
    %vm746 = vweird.f32 %v739
    %vm747 = vmor %vm745, %vm746
    %v748 = vsel %vm747, %v739, %v744
    %v749 = vrsqrt.pop %v474
    %v750 = vmul.f32 %v749, %v474
    %v751 = vmul.f32 %v750, %v749
    %v752 = vmul.f32 0.5, %v751
    %v753 = vsub.f32 1.5, %v752
    %v754 = vmul.f32 %v749, %v753
    %vm755 = vweird.f32 %v474
    %vm756 = vweird.f32 %v749
    %vm757 = vmor %vm755, %vm756
    %v758 = vsel %vm757, %v749, %v754
    %v759 = vrsqrt.pop %v475
    %v760 = vmul.f32 %v759, %v475
    %v761 = vmul.f32 %v760, %v759
    %v762 = vmul.f32 0.5, %v761
    %v763 = vsub.f32 1.5, %v762
    %v764 = vmul.f32 %v759, %v763
    %vm765 = vweird.f32 %v475
    %vm766 = vweird.f32 %v759
    %vm767 = vmor %vm765, %vm766
    %v768 = vsel %vm767, %v759, %v764
    %v769 = vrsqrt.pop %v476
    %v770 = vmul.f32 %v769, %v476
    %v771 = vmul.f32 %v770, %v769
    %v772 = vmul.f32 0.5, %v771
    %v773 = vsub.f32 1.5, %v772
    %v774 = vmul.f32 %v769, %v773
    %vm775 = vweird.f32 %v476
    %vm776 = vweird.f32 %v769
    %vm777 = vmor %vm775, %vm776
    %v778 = vsel %vm777, %v769, %v774
    %v779 = vrsqrt.pop %v477
    %v780 = vmul.f32 %v779, %v477
    %v781 = vmul.f32 %v780, %v779
    %v782 = vmul.f32 0.5, %v781
    %v783 = vsub.f32 1.5, %v782
    %v784 = vmul.f32 %v779, %v783
    %vm785 = vweird.f32 %v477
    %vm786 = vweird.f32 %v779
    %vm787 = vmor %vm785, %vm786
    %v788 = vsel %vm787, %v779, %v784
    %v789 = vrsqrt.pop %v478
    %v790 = vmul.f32 %v789, %v478
    %v791 = vmul.f32 %v790, %v789
    %v792 = vmul.f32 0.5, %v791
    %v793 = vsub.f32 1.5, %v792
    %v794 = vmul.f32 %v789, %v793
    %vm795 = vweird.f32 %v478
    %vm796 = vweird.f32 %v789
    %vm797 = vmor %vm795, %vm796
    %v798 = vsel %vm797, %v789, %v794
    %v799 = vmul.f32 %v31, %v488
    %v800 = vmul.f32 %v32, %v488
    %v801 = vmul.f32 %v33, %v488
    %v802 = vmul.f32 %v34, %v488
    %v803 = vmul.f32 %v35, %v498
    %v804 = vmul.f32 %v36, %v498
    %v805 = vmul.f32 %v37, %v498
    %v806 = vmul.f32 %v38, %v498
    %v807 = vmul.f32 %v39, %v508
    %v808 = vmul.f32 %v40, %v508
    %v809 = vmul.f32 %v41, %v508
    %v810 = vmul.f32 %v42, %v508
    %v811 = vmul.f32 %v43, %v518
    %v812 = vmul.f32 %v44, %v518
    %v813 = vmul.f32 %v45, %v518
    %v814 = vmul.f32 %v46, %v518
    %v815 = vmul.f32 %v47, %v528
    %v816 = vmul.f32 %v48, %v528
    %v817 = vmul.f32 %v49, %v528
    %v818 = vmul.f32 %v50, %v528
    %v819 = vmul.f32 %v51, %v538
    %v820 = vmul.f32 %v52, %v538
    %v821 = vmul.f32 %v53, %v538
    %v822 = vmul.f32 %v54, %v538
    %v823 = vmul.f32 %v55, %v548
    %v824 = vmul.f32 %v56, %v548
    %v825 = vmul.f32 %v57, %v548
    %v826 = vmul.f32 %v58, %v548
    %v827 = vmul.f32 %v59, %v558
    %v828 = vmul.f32 %v60, %v558
    %v829 = vmul.f32 %v61, %v558
    %v830 = vmul.f32 %v62, %v558
    %v831 = vmul.f32 %v63, %v568
    %v832 = vmul.f32 %v64, %v568
    %v833 = vmul.f32 %v65, %v568
    %v834 = vmul.f32 %v66, %v568
    %v835 = vmul.f32 %v67, %v578
    %v836 = vmul.f32 %v68, %v578
    %v837 = vmul.f32 %v69, %v578
    %v838 = vmul.f32 %v70, %v578
    %v839 = vmul.f32 %v71, %v588
    %v840 = vmul.f32 %v72, %v588
    %v841 = vmul.f32 %v73, %v588
    %v842 = vmul.f32 %v74, %v588
    %v843 = vmul.f32 %v75, %v598
    %v844 = vmul.f32 %v76, %v598
    %v845 = vmul.f32 %v77, %v598
    %v846 = vmul.f32 %v78, %v598
    %v847 = vmul.f32 %v79, %v608
    %v848 = vmul.f32 %v80, %v608
    %v849 = vmul.f32 %v81, %v608
    %v850 = vmul.f32 %v82, %v608
    %v851 = vmul.f32 %v83, %v618
    %v852 = vmul.f32 %v84, %v618
    %v853 = vmul.f32 %v85, %v618
    %v854 = vmul.f32 %v86, %v618
    %v855 = vmul.f32 %v87, %v628
    %v856 = vmul.f32 %v88, %v628
    %v857 = vmul.f32 %v89, %v628
    %v858 = vmul.f32 %v90, %v628
    %v859 = vmul.f32 %v91, %v638
    %v860 = vmul.f32 %v92, %v638
    %v861 = vmul.f32 %v93, %v638
    %v862 = vmul.f32 %v94, %v638
    %v863 = vmul.f32 %v95, %v648
    %v864 = vmul.f32 %v96, %v648
    %v865 = vmul.f32 %v97, %v648
    %v866 = vmul.f32 %v98, %v648
    %v867 = vmul.f32 %v99, %v658
    %v868 = vmul.f32 %v100, %v658
    %v869 = vmul.f32 %v101, %v658
    %v870 = vmul.f32 %v102, %v658
    %v871 = vmul.f32 %v103, %v668
    %v872 = vmul.f32 %v104, %v668
    %v873 = vmul.f32 %v105, %v668
    %v874 = vmul.f32 %v106, %v668
    %v875 = vmul.f32 %v107, %v678
    %v876 = vmul.f32 %v108, %v678
    %v877 = vmul.f32 %v109, %v678
    %v878 = vmul.f32 %v110, %v678
    %v879 = vmul.f32 %v111, %v688
    %v880 = vmul.f32 %v112, %v688
    %v881 = vmul.f32 %v113, %v688
    %v882 = vmul.f32 %v114, %v688
    %v883 = vmul.f32 %v115, %v698
    %v884 = vmul.f32 %v116, %v698
    %v885 = vmul.f32 %v117, %v698
    %v886 = vmul.f32 %v118, %v698
    %v887 = vmul.f32 %v119, %v708
    %v888 = vmul.f32 %v120, %v708
    %v889 = vmul.f32 %v121, %v708
    %v890 = vmul.f32 %v122, %v708
    %v891 = vmul.f32 %v123, %v718
    %v892 = vmul.f32 %v124, %v718
    %v893 = vmul.f32 %v125, %v718
    %v894 = vmul.f32 %v126, %v718
    %v895 = vmul.f32 %v127, %v728
    %v896 = vmul.f32 %v128, %v728
    %v897 = vmul.f32 %v129, %v728
    %v898 = vmul.f32 %v130, %v728
    %v899 = vmul.f32 %v131, %v738
    %v900 = vmul.f32 %v132, %v738
    %v901 = vmul.f32 %v133, %v738
    %v902 = vmul.f32 %v134, %v738
    %v903 = vmul.f32 %v135, %v748
    %v904 = vmul.f32 %v136, %v748
    %v905 = vmul.f32 %v137, %v748
    %v906 = vmul.f32 %v138, %v748
    %v907 = vmul.f32 %v139, %v758
    %v908 = vmul.f32 %v140, %v758
    %v909 = vmul.f32 %v141, %v758
    %v910 = vmul.f32 %v142, %v758
    %v911 = vmul.f32 %v143, %v768
    %v912 = vmul.f32 %v144, %v768
    %v913 = vmul.f32 %v145, %v768
    %v914 = vmul.f32 %v146, %v768
    %v915 = vmul.f32 %v147, %v778
    %v916 = vmul.f32 %v148, %v778
    %v917 = vmul.f32 %v149, %v778
    %v918 = vmul.f32 %v150, %v778
    %v919 = vmul.f32 %v151, %v788
    %v920 = vmul.f32 %v152, %v788
    %v921 = vmul.f32 %v153, %v788
    %v922 = vmul.f32 %v154, %v788
    %v923 = vmul.f32 %v155, %v798
    %v924 = vmul.f32 %v156, %v798
    %v925 = vmul.f32 %v157, %v798
    %v926 = vmul.f32 %v158, %v798
    %927 = vxpose.xlu0.b32.start [1/16] %v799, 128
    %928 = vxpose.xlu0.b32.cont [2/16] %v803, 128
    %929 = vxpose.xlu0.b32.cont [3/16] %v807, 128
    %930 = vxpose.xlu0.b32.cont [4/16] %v811, 128
    %931 = vxpose.xlu0.b32.cont [5/16] %v815, 128
    %932 = vxpose.xlu0.b32.cont [6/16] %v819, 128
    %933 = vxpose.xlu0.b32.cont [7/16] %v823, 128
    %934 = vxpose.xlu0.b32.cont [8/16] %v827, 128
    %935 = vxpose.xlu0.b32.cont [9/16] %v831, 128
    %936 = vxpose.xlu0.b32.cont [10/16] %v835, 128
    %937 = vxpose.xlu0.b32.cont [11/16] %v839, 128
    %938 = vxpose.xlu0.b32.cont [12/16] %v843, 128
    %939 = vxpose.xlu0.b32.cont [13/16] %v847, 128
    %940 = vxpose.xlu0.b32.cont [14/16] %v851, 128
    %941 = vxpose.xlu0.b32.cont [15/16] %v855, 128
    %942 = vxpose.xlu0.b32.end [16/16] %v859, 128
    %v943 = vpop.trf.xlu0
    %v944 = vpop.trf.xlu0
    %v945 = vpop.trf.xlu0
    %v946 = vpop.trf.xlu0
    %v947 = vpop.trf.xlu0
    %v948 = vpop.trf.xlu0
    %v949 = vpop.trf.xlu0
    %v950 = vpop.trf.xlu0
    %v951 = vpop.trf.xlu0
    %v952 = vpop.trf.xlu0
    %v953 = vpop.trf.xlu0
    %v954 = vpop.trf.xlu0
    %v955 = vpop.trf.xlu0
    %v956 = vpop.trf.xlu0
    %v957 = vpop.trf.xlu0
    %v958 = vpop.trf.xlu0
    %959 = vxpose.xlu0.b32.start [1/16] %v800, 128
    %960 = vxpose.xlu0.b32.cont [2/16] %v804, 128
    %961 = vxpose.xlu0.b32.cont [3/16] %v808, 128
    %962 = vxpose.xlu0.b32.cont [4/16] %v812, 128
    %963 = vxpose.xlu0.b32.cont [5/16] %v816, 128
    %964 = vxpose.xlu0.b32.cont [6/16] %v820, 128
    %965 = vxpose.xlu0.b32.cont [7/16] %v824, 128
    %966 = vxpose.xlu0.b32.cont [8/16] %v828, 128
    %967 = vxpose.xlu0.b32.cont [9/16] %v832, 128
    %968 = vxpose.xlu0.b32.cont [10/16] %v836, 128
    %969 = vxpose.xlu0.b32.cont [11/16] %v840, 128
    %970 = vxpose.xlu0.b32.cont [12/16] %v844, 128
    %971 = vxpose.xlu0.b32.cont [13/16] %v848, 128
    %972 = vxpose.xlu0.b32.cont [14/16] %v852, 128
    %973 = vxpose.xlu0.b32.cont [15/16] %v856, 128
    %974 = vxpose.xlu0.b32.end [16/16] %v860, 128
    %v975 = vpop.trf.xlu0
    %v976 = vpop.trf.xlu0
    %v977 = vpop.trf.xlu0
    %v978 = vpop.trf.xlu0
    %v979 = vpop.trf.xlu0
    %v980 = vpop.trf.xlu0
    %v981 = vpop.trf.xlu0
    %v982 = vpop.trf.xlu0
    %v983 = vpop.trf.xlu0
    %v984 = vpop.trf.xlu0
    %v985 = vpop.trf.xlu0
    %v986 = vpop.trf.xlu0
    %v987 = vpop.trf.xlu0
    %v988 = vpop.trf.xlu0
    %v989 = vpop.trf.xlu0
    %v990 = vpop.trf.xlu0
    %991 = vxpose.xlu0.b32.start [1/16] %v801, 128
    %992 = vxpose.xlu0.b32.cont [2/16] %v805, 128
    %993 = vxpose.xlu0.b32.cont [3/16] %v809, 128
    %994 = vxpose.xlu0.b32.cont [4/16] %v813, 128
    %995 = vxpose.xlu0.b32.cont [5/16] %v817, 128
    %996 = vxpose.xlu0.b32.cont [6/16] %v821, 128
    %997 = vxpose.xlu0.b32.cont [7/16] %v825, 128
    %998 = vxpose.xlu0.b32.cont [8/16] %v829, 128
    %999 = vxpose.xlu0.b32.cont [9/16] %v833, 128
    %1000 = vxpose.xlu0.b32.cont [10/16] %v837, 128
    %1001 = vxpose.xlu0.b32.cont [11/16] %v841, 128
    %1002 = vxpose.xlu0.b32.cont [12/16] %v845, 128
    %1003 = vxpose.xlu0.b32.cont [13/16] %v849, 128
    %1004 = vxpose.xlu0.b32.cont [14/16] %v853, 128
    %1005 = vxpose.xlu0.b32.cont [15/16] %v857, 128
    %1006 = vxpose.xlu0.b32.end [16/16] %v861, 128
    %v1007 = vpop.trf.xlu0
    %v1008 = vpop.trf.xlu0
    %v1009 = vpop.trf.xlu0
    %v1010 = vpop.trf.xlu0
    %v1011 = vpop.trf.xlu0
    %v1012 = vpop.trf.xlu0
    %v1013 = vpop.trf.xlu0
    %v1014 = vpop.trf.xlu0
    %v1015 = vpop.trf.xlu0
    %v1016 = vpop.trf.xlu0
    %v1017 = vpop.trf.xlu0
    %v1018 = vpop.trf.xlu0
    %v1019 = vpop.trf.xlu0
    %v1020 = vpop.trf.xlu0
    %v1021 = vpop.trf.xlu0
    %v1022 = vpop.trf.xlu0
    %1023 = vxpose.xlu0.b32.start [1/16] %v802, 128
    %1024 = vxpose.xlu0.b32.cont [2/16] %v806, 128
    %1025 = vxpose.xlu0.b32.cont [3/16] %v810, 128
    %1026 = vxpose.xlu0.b32.cont [4/16] %v814, 128
    %1027 = vxpose.xlu0.b32.cont [5/16] %v818, 128
    %1028 = vxpose.xlu0.b32.cont [6/16] %v822, 128
    %1029 = vxpose.xlu0.b32.cont [7/16] %v826, 128
    %1030 = vxpose.xlu0.b32.cont [8/16] %v830, 128
    %1031 = vxpose.xlu0.b32.cont [9/16] %v834, 128
    %1032 = vxpose.xlu0.b32.cont [10/16] %v838, 128
    %1033 = vxpose.xlu0.b32.cont [11/16] %v842, 128
    %1034 = vxpose.xlu0.b32.cont [12/16] %v846, 128
    %1035 = vxpose.xlu0.b32.cont [13/16] %v850, 128
    %1036 = vxpose.xlu0.b32.cont [14/16] %v854, 128
    %1037 = vxpose.xlu0.b32.cont [15/16] %v858, 128
    %1038 = vxpose.xlu0.b32.end [16/16] %v862, 128
    %v1039 = vpop.trf.xlu0
    %v1040 = vpop.trf.xlu0
    %v1041 = vpop.trf.xlu0
    %v1042 = vpop.trf.xlu0
    %v1043 = vpop.trf.xlu0
    %v1044 = vpop.trf.xlu0
    %v1045 = vpop.trf.xlu0
    %v1046 = vpop.trf.xlu0
    %v1047 = vpop.trf.xlu0
    %v1048 = vpop.trf.xlu0
    %v1049 = vpop.trf.xlu0
    %v1050 = vpop.trf.xlu0
    %v1051 = vpop.trf.xlu0
    %v1052 = vpop.trf.xlu0
    %v1053 = vpop.trf.xlu0
    %v1054 = vpop.trf.xlu0
    %1055 = vxpose.xlu0.b32.start [1/16] %v863, 128
    %1056 = vxpose.xlu0.b32.cont [2/16] %v867, 128
    %1057 = vxpose.xlu0.b32.cont [3/16] %v871, 128
    %1058 = vxpose.xlu0.b32.cont [4/16] %v875, 128
    %1059 = vxpose.xlu0.b32.cont [5/16] %v879, 128
    %1060 = vxpose.xlu0.b32.cont [6/16] %v883, 128
    %1061 = vxpose.xlu0.b32.cont [7/16] %v887, 128
    %1062 = vxpose.xlu0.b32.cont [8/16] %v891, 128
    %1063 = vxpose.xlu0.b32.cont [9/16] %v895, 128
    %1064 = vxpose.xlu0.b32.cont [10/16] %v899, 128
    %1065 = vxpose.xlu0.b32.cont [11/16] %v903, 128
    %1066 = vxpose.xlu0.b32.cont [12/16] %v907, 128
    %1067 = vxpose.xlu0.b32.cont [13/16] %v911, 128
    %1068 = vxpose.xlu0.b32.cont [14/16] %v915, 128
    %1069 = vxpose.xlu0.b32.cont [15/16] %v919, 128
    %1070 = vxpose.xlu0.b32.end [16/16] %v923, 128
    %v1071 = vpop.trf.xlu0
    %v1072 = vpop.trf.xlu0
    %v1073 = vpop.trf.xlu0
    %v1074 = vpop.trf.xlu0
    %v1075 = vpop.trf.xlu0
    %v1076 = vpop.trf.xlu0
    %v1077 = vpop.trf.xlu0
    %v1078 = vpop.trf.xlu0
    %v1079 = vpop.trf.xlu0
    %v1080 = vpop.trf.xlu0
    %v1081 = vpop.trf.xlu0
    %v1082 = vpop.trf.xlu0
    %v1083 = vpop.trf.xlu0
    %v1084 = vpop.trf.xlu0
    %v1085 = vpop.trf.xlu0
    %v1086 = vpop.trf.xlu0
    %1087 = vxpose.xlu0.b32.start [1/16] %v864, 128
    %1088 = vxpose.xlu0.b32.cont [2/16] %v868, 128
    %1089 = vxpose.xlu0.b32.cont [3/16] %v872, 128
    %1090 = vxpose.xlu0.b32.cont [4/16] %v876, 128
    %1091 = vxpose.xlu0.b32.cont [5/16] %v880, 128
    %1092 = vxpose.xlu0.b32.cont [6/16] %v884, 128
    %1093 = vxpose.xlu0.b32.cont [7/16] %v888, 128
    %1094 = vxpose.xlu0.b32.cont [8/16] %v892, 128
    %1095 = vxpose.xlu0.b32.cont [9/16] %v896, 128
    %1096 = vxpose.xlu0.b32.cont [10/16] %v900, 128
    %1097 = vxpose.xlu0.b32.cont [11/16] %v904, 128
    %1098 = vxpose.xlu0.b32.cont [12/16] %v908, 128
    %1099 = vxpose.xlu0.b32.cont [13/16] %v912, 128
    %1100 = vxpose.xlu0.b32.cont [14/16] %v916, 128
    %1101 = vxpose.xlu0.b32.cont [15/16] %v920, 128
    %1102 = vxpose.xlu0.b32.end [16/16] %v924, 128
    %v1103 = vpop.trf.xlu0
    %v1104 = vpop.trf.xlu0
    %v1105 = vpop.trf.xlu0
    %v1106 = vpop.trf.xlu0
    %v1107 = vpop.trf.xlu0
    %v1108 = vpop.trf.xlu0
    %v1109 = vpop.trf.xlu0
    %v1110 = vpop.trf.xlu0
    %v1111 = vpop.trf.xlu0
    %v1112 = vpop.trf.xlu0
    %v1113 = vpop.trf.xlu0
    %v1114 = vpop.trf.xlu0
    %v1115 = vpop.trf.xlu0
    %v1116 = vpop.trf.xlu0
    %v1117 = vpop.trf.xlu0
    %v1118 = vpop.trf.xlu0
    %1119 = vxpose.xlu0.b32.start [1/16] %v865, 128
    %1120 = vxpose.xlu0.b32.cont [2/16] %v869, 128
    %1121 = vxpose.xlu0.b32.cont [3/16] %v873, 128
    %1122 = vxpose.xlu0.b32.cont [4/16] %v877, 128
    %1123 = vxpose.xlu0.b32.cont [5/16] %v881, 128
    %1124 = vxpose.xlu0.b32.cont [6/16] %v885, 128
    %1125 = vxpose.xlu0.b32.cont [7/16] %v889, 128
    %1126 = vxpose.xlu0.b32.cont [8/16] %v893, 128
    %1127 = vxpose.xlu0.b32.cont [9/16] %v897, 128
    %1128 = vxpose.xlu0.b32.cont [10/16] %v901, 128
    %1129 = vxpose.xlu0.b32.cont [11/16] %v905, 128
    %1130 = vxpose.xlu0.b32.cont [12/16] %v909, 128
    %1131 = vxpose.xlu0.b32.cont [13/16] %v913, 128
    %1132 = vxpose.xlu0.b32.cont [14/16] %v917, 128
    %1133 = vxpose.xlu0.b32.cont [15/16] %v921, 128
    %1134 = vxpose.xlu0.b32.end [16/16] %v925, 128
    %v1135 = vpop.trf.xlu0
    %v1136 = vpop.trf.xlu0
    %v1137 = vpop.trf.xlu0
    %v1138 = vpop.trf.xlu0
    %v1139 = vpop.trf.xlu0
    %v1140 = vpop.trf.xlu0
    %v1141 = vpop.trf.xlu0
    %v1142 = vpop.trf.xlu0
    %v1143 = vpop.trf.xlu0
    %v1144 = vpop.trf.xlu0
    %v1145 = vpop.trf.xlu0
    %v1146 = vpop.trf.xlu0
    %v1147 = vpop.trf.xlu0
    %v1148 = vpop.trf.xlu0
    %v1149 = vpop.trf.xlu0
    %v1150 = vpop.trf.xlu0
    %1151 = vxpose.xlu0.b32.start [1/16] %v866, 128
    %1152 = vxpose.xlu0.b32.cont [2/16] %v870, 128
    %1153 = vxpose.xlu0.b32.cont [3/16] %v874, 128
    %1154 = vxpose.xlu0.b32.cont [4/16] %v878, 128
    %1155 = vxpose.xlu0.b32.cont [5/16] %v882, 128
    %1156 = vxpose.xlu0.b32.cont [6/16] %v886, 128
    %1157 = vxpose.xlu0.b32.cont [7/16] %v890, 128
    %1158 = vxpose.xlu0.b32.cont [8/16] %v894, 128
    %1159 = vxpose.xlu0.b32.cont [9/16] %v898, 128
    %1160 = vxpose.xlu0.b32.cont [10/16] %v902, 128
    %1161 = vxpose.xlu0.b32.cont [11/16] %v906, 128
    %1162 = vxpose.xlu0.b32.cont [12/16] %v910, 128
    %1163 = vxpose.xlu0.b32.cont [13/16] %v914, 128
    %1164 = vxpose.xlu0.b32.cont [14/16] %v918, 128
    %1165 = vxpose.xlu0.b32.cont [15/16] %v922, 128
    %1166 = vxpose.xlu0.b32.end [16/16] %v926, 128
    %v1167 = vpop.trf.xlu0
    %v1168 = vpop.trf.xlu0
    %v1169 = vpop.trf.xlu0
    %v1170 = vpop.trf.xlu0
    %v1171 = vpop.trf.xlu0
    %v1172 = vpop.trf.xlu0
    %v1173 = vpop.trf.xlu0
    %v1174 = vpop.trf.xlu0
    %v1175 = vpop.trf.xlu0
    %v1176 = vpop.trf.xlu0
    %v1177 = vpop.trf.xlu0
    %v1178 = vpop.trf.xlu0
    %v1179 = vpop.trf.xlu0
    %v1180 = vpop.trf.xlu0
    %v1181 = vpop.trf.xlu0
    %v1182 = vpop.trf.xlu0
    %v1183 = vpack.c.bf16 %v1071, %v943
    %v1184 = vpack.c.bf16 %v1072, %v944
    %v1185 = vpack.c.bf16 %v1073, %v945
    %v1186 = vpack.c.bf16 %v1074, %v946
    %v1187 = vpack.c.bf16 %v1075, %v947
    %v1188 = vpack.c.bf16 %v1076, %v948
    %v1189 = vpack.c.bf16 %v1077, %v949
    %v1190 = vpack.c.bf16 %v1078, %v950
    %v1191 = vpack.c.bf16 %v1079, %v951
    %v1192 = vpack.c.bf16 %v1080, %v952
    %v1193 = vpack.c.bf16 %v1081, %v953
    %v1194 = vpack.c.bf16 %v1082, %v954
    %v1195 = vpack.c.bf16 %v1083, %v955
    %v1196 = vpack.c.bf16 %v1084, %v956
    %v1197 = vpack.c.bf16 %v1085, %v957
    %v1198 = vpack.c.bf16 %v1086, %v958
    %v1199 = vpack.c.bf16 %v1103, %v975
    %v1200 = vpack.c.bf16 %v1104, %v976
    %v1201 = vpack.c.bf16 %v1105, %v977
    %v1202 = vpack.c.bf16 %v1106, %v978
    %v1203 = vpack.c.bf16 %v1107, %v979
    %v1204 = vpack.c.bf16 %v1108, %v980
    %v1205 = vpack.c.bf16 %v1109, %v981
    %v1206 = vpack.c.bf16 %v1110, %v982
    %v1207 = vpack.c.bf16 %v1111, %v983
    %v1208 = vpack.c.bf16 %v1112, %v984
    %v1209 = vpack.c.bf16 %v1113, %v985
    %v1210 = vpack.c.bf16 %v1114, %v986
    %v1211 = vpack.c.bf16 %v1115, %v987
    %v1212 = vpack.c.bf16 %v1116, %v988
    %v1213 = vpack.c.bf16 %v1117, %v989
    %v1214 = vpack.c.bf16 %v1118, %v990
    %v1215 = vpack.c.bf16 %v1135, %v1007
    %v1216 = vpack.c.bf16 %v1136, %v1008
    %v1217 = vpack.c.bf16 %v1137, %v1009
    %v1218 = vpack.c.bf16 %v1138, %v1010
    %v1219 = vpack.c.bf16 %v1139, %v1011
    %v1220 = vpack.c.bf16 %v1140, %v1012
    %v1221 = vpack.c.bf16 %v1141, %v1013
    %v1222 = vpack.c.bf16 %v1142, %v1014
    %v1223 = vpack.c.bf16 %v1143, %v1015
    %v1224 = vpack.c.bf16 %v1144, %v1016
    %v1225 = vpack.c.bf16 %v1145, %v1017
    %v1226 = vpack.c.bf16 %v1146, %v1018
    %v1227 = vpack.c.bf16 %v1147, %v1019
    %v1228 = vpack.c.bf16 %v1148, %v1020
    %v1229 = vpack.c.bf16 %v1149, %v1021
    %v1230 = vpack.c.bf16 %v1150, %v1022
    %v1231 = vpack.c.bf16 %v1167, %v1039
    %v1232 = vpack.c.bf16 %v1168, %v1040
    %v1233 = vpack.c.bf16 %v1169, %v1041
    %v1234 = vpack.c.bf16 %v1170, %v1042
    %v1235 = vpack.c.bf16 %v1171, %v1043
    %v1236 = vpack.c.bf16 %v1172, %v1044
    %v1237 = vpack.c.bf16 %v1173, %v1045
    %v1238 = vpack.c.bf16 %v1174, %v1046
    %v1239 = vpack.c.bf16 %v1175, %v1047
    %v1240 = vpack.c.bf16 %v1176, %v1048
    %v1241 = vpack.c.bf16 %v1177, %v1049
    %v1242 = vpack.c.bf16 %v1178, %v1050
    %v1243 = vpack.c.bf16 %v1179, %v1051
    %v1244 = vpack.c.bf16 %v1180, %v1052
    %v1245 = vpack.c.bf16 %v1181, %v1053
    %v1246 = vpack.c.bf16 %v1182, %v1054
    %1247 = vst [vmem:[#allocation6] sm:$0xff] %v1183
    %1248 = vst [vmem:[#allocation6 + $0x8] sm:$0xff] %v1184
    %1249 = vst [vmem:[#allocation6 + $0x10] sm:$0xff] %v1185
    %1250 = vst [vmem:[#allocation6 + $0x18] sm:$0xff] %v1186
    %1251 = vst [vmem:[#allocation6 + $0x20] sm:$0xff] %v1187
    %1252 = vst [vmem:[#allocation6 + $0x28] sm:$0xff] %v1188
    %1253 = vst [vmem:[#allocation6 + $0x30] sm:$0xff] %v1189
    %1254 = vst [vmem:[#allocation6 + $0x38] sm:$0xff] %v1190
    %1255 = vst [vmem:[#allocation6 + $0x40] sm:$0xff] %v1191
    %1256 = vst [vmem:[#allocation6 + $0x48] sm:$0xff] %v1192
    %1257 = vst [vmem:[#allocation6 + $0x50] sm:$0xff] %v1193
    %1258 = vst [vmem:[#allocation6 + $0x58] sm:$0xff] %v1194
    %1259 = vst [vmem:[#allocation6 + $0x60] sm:$0xff] %v1195
    %1260 = vst [vmem:[#allocation6 + $0x68] sm:$0xff] %v1196
    %1261 = vst [vmem:[#allocation6 + $0x70] sm:$0xff] %v1197
    %1262 = vst [vmem:[#allocation6 + $0x78] sm:$0xff] %v1198
    %1263 = vst [vmem:[#allocation6 + $0x80] sm:$0xff] %v1199
    %1264 = vst [vmem:[#allocation6 + $0x88] sm:$0xff] %v1200
    %1265 = vst [vmem:[#allocation6 + $0x90] sm:$0xff] %v1201
    %1266 = vst [vmem:[#allocation6 + $0x98] sm:$0xff] %v1202
    %1267 = vst [vmem:[#allocation6 + $0xa0] sm:$0xff] %v1203
    %1268 = vst [vmem:[#allocation6 + $0xa8] sm:$0xff] %v1204
    %1269 = vst [vmem:[#allocation6 + $0xb0] sm:$0xff] %v1205
    %1270 = vst [vmem:[#allocation6 + $0xb8] sm:$0xff] %v1206
    %1271 = vst [vmem:[#allocation6 + $0xc0] sm:$0xff] %v1207
    %1272 = vst [vmem:[#allocation6 + $0xc8] sm:$0xff] %v1208
    %1273 = vst [vmem:[#allocation6 + $0xd0] sm:$0xff] %v1209
    %1274 = vst [vmem:[#allocation6 + $0xd8] sm:$0xff] %v1210
    %1275 = vst [vmem:[#allocation6 + $0xe0] sm:$0xff] %v1211
    %1276 = vst [vmem:[#allocation6 + $0xe8] sm:$0xff] %v1212
    %1277 = vst [vmem:[#allocation6 + $0xf0] sm:$0xff] %v1213
    %1278 = vst [vmem:[#allocation6 + $0xf8] sm:$0xff] %v1214
    %1279 = vst [vmem:[#allocation6 + $0x100] sm:$0xff] %v1215
    %1280 = vst [vmem:[#allocation6 + $0x108] sm:$0xff] %v1216
    %1281 = vst [vmem:[#allocation6 + $0x110] sm:$0xff] %v1217
    %1282 = vst [vmem:[#allocation6 + $0x118] sm:$0xff] %v1218
    %1283 = vst [vmem:[#allocation6 + $0x120] sm:$0xff] %v1219
    %1284 = vst [vmem:[#allocation6 + $0x128] sm:$0xff] %v1220
    %1285 = vst [vmem:[#allocation6 + $0x130] sm:$0xff] %v1221
    %1286 = vst [vmem:[#allocation6 + $0x138] sm:$0xff] %v1222
    %1287 = vst [vmem:[#allocation6 + $0x140] sm:$0xff] %v1223
    %1288 = vst [vmem:[#allocation6 + $0x148] sm:$0xff] %v1224
    %1289 = vst [vmem:[#allocation6 + $0x150] sm:$0xff] %v1225
    %1290 = vst [vmem:[#allocation6 + $0x158] sm:$0xff] %v1226
    %1291 = vst [vmem:[#allocation6 + $0x160] sm:$0xff] %v1227
    %1292 = vst [vmem:[#allocation6 + $0x168] sm:$0xff] %v1228
    %1293 = vst [vmem:[#allocation6 + $0x170] sm:$0xff] %v1229
    %1294 = vst [vmem:[#allocation6 + $0x178] sm:$0xff] %v1230
    %1295 = vst [vmem:[#allocation6 + $0x180] sm:$0xff] %v1231
    %1296 = vst [vmem:[#allocation6 + $0x188] sm:$0xff] %v1232
    %1297 = vst [vmem:[#allocation6 + $0x190] sm:$0xff] %v1233
    %1298 = vst [vmem:[#allocation6 + $0x198] sm:$0xff] %v1234
    %1299 = vst [vmem:[#allocation6 + $0x1a0] sm:$0xff] %v1235
    %1300 = vst [vmem:[#allocation6 + $0x1a8] sm:$0xff] %v1236
    %1301 = vst [vmem:[#allocation6 + $0x1b0] sm:$0xff] %v1237
    %1302 = vst [vmem:[#allocation6 + $0x1b8] sm:$0xff] %v1238
    %1303 = vst [vmem:[#allocation6 + $0x1c0] sm:$0xff] %v1239
    %1304 = vst [vmem:[#allocation6 + $0x1c8] sm:$0xff] %v1240
    %1305 = vst [vmem:[#allocation6 + $0x1d0] sm:$0xff] %v1241
    %1306 = vst [vmem:[#allocation6 + $0x1d8] sm:$0xff] %v1242
    %1307 = vst [vmem:[#allocation6 + $0x1e0] sm:$0xff] %v1243
    %1308 = vst [vmem:[#allocation6 + $0x1e8] sm:$0xff] %v1244
    %1309 = vst [vmem:[#allocation6 + $0x1f0] sm:$0xff] %v1245
    %1310 = vst [vmem:[#allocation6 + $0x1f8] sm:$0xff] %v1246
    %1311 = vmatpush.xpose.msra.mxu0 %v859
    %1312 = vmatpush.xpose.msra.mxu0 %v855
    %1313 = vmatpush.xpose.msra.mxu0 %v851
    %1314 = vmatpush.xpose.msra.mxu0 %v847
    %1315 = vmatpush.xpose.msra.mxu0 %v843
    %1316 = vmatpush.xpose.msra.mxu0 %v839
    %1317 = vmatpush.xpose.msra.mxu0 %v835
    %1318 = vmatpush.xpose.msra.mxu0 %v831
    %1319 = vmatpush.xpose.msra.mxu0 %v827
    %1320 = vmatpush.xpose.msra.mxu0 %v823
    %1321 = vmatpush.xpose.msra.mxu0 %v819
    %1322 = vmatpush.xpose.msra.mxu0 %v815
    %1323 = vmatpush.xpose.msra.mxu0 %v811
    %1324 = vmatpush.xpose.msra.mxu0 %v807
    %1325 = vmatpush.xpose.msra.mxu0 %v803
    %1326 = vmatpush.xpose.msra.mxu0 %v799
    %1327 = vmatmul.f32.gmra.mxu0 %v799
    %v1328 = vpop.f32.mrf.mxu0
    %v1329 = vadd.f32 0.0, %v1328
    %1330 = vmatmul.f32.gmra.mxu0 %v803
    %v1331 = vpop.f32.mrf.mxu0
    %v1332 = vadd.f32 0.0, %v1331
    %1333 = vmatmul.f32.gmra.mxu0 %v807
    %v1334 = vpop.f32.mrf.mxu0
    %v1335 = vadd.f32 0.0, %v1334
    %1336 = vmatmul.f32.gmra.mxu0 %v811
    %v1337 = vpop.f32.mrf.mxu0
    %v1338 = vadd.f32 0.0, %v1337
    %1339 = vmatmul.f32.gmra.mxu0 %v815
    %v1340 = vpop.f32.mrf.mxu0
    %v1341 = vadd.f32 0.0, %v1340
    %1342 = vmatmul.f32.gmra.mxu0 %v819
    %v1343 = vpop.f32.mrf.mxu0
    %v1344 = vadd.f32 0.0, %v1343
    %1345 = vmatmul.f32.gmra.mxu0 %v823
    %v1346 = vpop.f32.mrf.mxu0
    %v1347 = vadd.f32 0.0, %v1346
    %1348 = vmatmul.f32.gmra.mxu0 %v827
    %v1349 = vpop.f32.mrf.mxu0
    %v1350 = vadd.f32 0.0, %v1349
    %1351 = vmatmul.f32.gmra.mxu0 %v831
    %v1352 = vpop.f32.mrf.mxu0
    %v1353 = vadd.f32 0.0, %v1352
    %1354 = vmatmul.f32.gmra.mxu0 %v835
    %v1355 = vpop.f32.mrf.mxu0
    %v1356 = vadd.f32 0.0, %v1355
    %1357 = vmatmul.f32.gmra.mxu0 %v839
    %v1358 = vpop.f32.mrf.mxu0
    %v1359 = vadd.f32 0.0, %v1358
    %1360 = vmatmul.f32.gmra.mxu0 %v843
    %v1361 = vpop.f32.mrf.mxu0
    %v1362 = vadd.f32 0.0, %v1361
    %1363 = vmatmul.f32.gmra.mxu0 %v847
    %v1364 = vpop.f32.mrf.mxu0
    %v1365 = vadd.f32 0.0, %v1364
    %1366 = vmatmul.f32.gmra.mxu0 %v851
    %v1367 = vpop.f32.mrf.mxu0
    %v1368 = vadd.f32 0.0, %v1367
    %1369 = vmatmul.f32.gmra.mxu0 %v855
    %v1370 = vpop.f32.mrf.mxu0
    %v1371 = vadd.f32 0.0, %v1370
    %1372 = vmatmul.f32.gmra.mxu0 %v859
    %v1373 = vpop.f32.mrf.mxu0
    %v1374 = vadd.f32 0.0, %v1373
    %1375 = vmatmul.f32.gmra.mxu0 %v863
    %v1376 = vpop.f32.mrf.mxu0
    %v1377 = vadd.f32 0.0, %v1376
    %1378 = vmatmul.f32.gmra.mxu0 %v867
    %v1379 = vpop.f32.mrf.mxu0
    %v1380 = vadd.f32 0.0, %v1379
    %1381 = vmatmul.f32.gmra.mxu0 %v871
    %v1382 = vpop.f32.mrf.mxu0
    %v1383 = vadd.f32 0.0, %v1382
    %1384 = vmatmul.f32.gmra.mxu0 %v875
    %v1385 = vpop.f32.mrf.mxu0
    %v1386 = vadd.f32 0.0, %v1385
    %1387 = vmatmul.f32.gmra.mxu0 %v879
    %v1388 = vpop.f32.mrf.mxu0
    %v1389 = vadd.f32 0.0, %v1388
    %1390 = vmatmul.f32.gmra.mxu0 %v883
    %v1391 = vpop.f32.mrf.mxu0
    %v1392 = vadd.f32 0.0, %v1391
    %1393 = vmatmul.f32.gmra.mxu0 %v887
    %v1394 = vpop.f32.mrf.mxu0
    %v1395 = vadd.f32 0.0, %v1394
    %1396 = vmatmul.f32.gmra.mxu0 %v891
    %v1397 = vpop.f32.mrf.mxu0
    %v1398 = vadd.f32 0.0, %v1397
    %1399 = vmatmul.f32.gmra.mxu0 %v895
    %v1400 = vpop.f32.mrf.mxu0
    %v1401 = vadd.f32 0.0, %v1400
    %1402 = vmatmul.f32.gmra.mxu0 %v899
    %v1403 = vpop.f32.mrf.mxu0
    %v1404 = vadd.f32 0.0, %v1403
    %1405 = vmatmul.f32.gmra.mxu0 %v903
    %v1406 = vpop.f32.mrf.mxu0
    %v1407 = vadd.f32 0.0, %v1406
    %1408 = vmatmul.f32.gmra.mxu0 %v907
    %v1409 = vpop.f32.mrf.mxu0
    %v1410 = vadd.f32 0.0, %v1409
    %1411 = vmatmul.f32.gmra.mxu0 %v911
    %v1412 = vpop.f32.mrf.mxu0
    %v1413 = vadd.f32 0.0, %v1412
    %1414 = vmatmul.f32.gmra.mxu0 %v915
    %v1415 = vpop.f32.mrf.mxu0
    %v1416 = vadd.f32 0.0, %v1415
    %1417 = vmatmul.f32.gmra.mxu0 %v919
    %v1418 = vpop.f32.mrf.mxu0
    %v1419 = vadd.f32 0.0, %v1418
    %1420 = vmatmul.f32.gmra.mxu0 %v923
    %v1421 = vpop.f32.mrf.mxu0
    %v1422 = vadd.f32 0.0, %v1421
    %1423 = vdwg.mxu0
    %1424 = vmatpush.xpose.msra.mxu0 %v860
    %1425 = vmatpush.xpose.msra.mxu0 %v856
    %1426 = vmatpush.xpose.msra.mxu0 %v852
    %1427 = vmatpush.xpose.msra.mxu0 %v848
    %1428 = vmatpush.xpose.msra.mxu0 %v844
    %1429 = vmatpush.xpose.msra.mxu0 %v840
    %1430 = vmatpush.xpose.msra.mxu0 %v836
    %1431 = vmatpush.xpose.msra.mxu0 %v832
    %1432 = vmatpush.xpose.msra.mxu0 %v828
    %1433 = vmatpush.xpose.msra.mxu0 %v824
    %1434 = vmatpush.xpose.msra.mxu0 %v820
    %1435 = vmatpush.xpose.msra.mxu0 %v816
    %1436 = vmatpush.xpose.msra.mxu0 %v812
    %1437 = vmatpush.xpose.msra.mxu0 %v808
    %1438 = vmatpush.xpose.msra.mxu0 %v804
    %1439 = vmatpush.xpose.msra.mxu0 %v800
    %1440 = vmatmul.f32.gmra.mxu0 %v800
    %v1441 = vpop.f32.mrf.mxu0
    %v1442 = vadd.f32 %v1329, %v1441
    %1443 = vmatmul.f32.gmra.mxu0 %v804
    %v1444 = vpop.f32.mrf.mxu0
    %v1445 = vadd.f32 %v1332, %v1444
    %1446 = vmatmul.f32.gmra.mxu0 %v808
    %v1447 = vpop.f32.mrf.mxu0
    %v1448 = vadd.f32 %v1335, %v1447
    %1449 = vmatmul.f32.gmra.mxu0 %v812
    %v1450 = vpop.f32.mrf.mxu0
    %v1451 = vadd.f32 %v1338, %v1450
    %1452 = vmatmul.f32.gmra.mxu0 %v816
    %v1453 = vpop.f32.mrf.mxu0
    %v1454 = vadd.f32 %v1341, %v1453
    %1455 = vmatmul.f32.gmra.mxu0 %v820
    %v1456 = vpop.f32.mrf.mxu0
    %v1457 = vadd.f32 %v1344, %v1456
    %1458 = vmatmul.f32.gmra.mxu0 %v824
    %v1459 = vpop.f32.mrf.mxu0
    %v1460 = vadd.f32 %v1347, %v1459
    %1461 = vmatmul.f32.gmra.mxu0 %v828
    %v1462 = vpop.f32.mrf.mxu0
    %v1463 = vadd.f32 %v1350, %v1462
    %1464 = vmatmul.f32.gmra.mxu0 %v832
    %v1465 = vpop.f32.mrf.mxu0
    %v1466 = vadd.f32 %v1353, %v1465
    %1467 = vmatmul.f32.gmra.mxu0 %v836
    %v1468 = vpop.f32.mrf.mxu0
    %v1469 = vadd.f32 %v1356, %v1468
    %1470 = vmatmul.f32.gmra.mxu0 %v840
    %v1471 = vpop.f32.mrf.mxu0
    %v1472 = vadd.f32 %v1359, %v1471
    %1473 = vmatmul.f32.gmra.mxu0 %v844
    %v1474 = vpop.f32.mrf.mxu0
    %v1475 = vadd.f32 %v1362, %v1474
    %1476 = vmatmul.f32.gmra.mxu0 %v848
    %v1477 = vpop.f32.mrf.mxu0
    %v1478 = vadd.f32 %v1365, %v1477
    %1479 = vmatmul.f32.gmra.mxu0 %v852
    %v1480 = vpop.f32.mrf.mxu0
    %v1481 = vadd.f32 %v1368, %v1480
    %1482 = vmatmul.f32.gmra.mxu0 %v856
    %v1483 = vpop.f32.mrf.mxu0
    %v1484 = vadd.f32 %v1371, %v1483
    %1485 = vmatmul.f32.gmra.mxu0 %v860
    %v1486 = vpop.f32.mrf.mxu0
    %v1487 = vadd.f32 %v1374, %v1486
    %1488 = vmatmul.f32.gmra.mxu0 %v864
    %v1489 = vpop.f32.mrf.mxu0
    %v1490 = vadd.f32 %v1377, %v1489
    %1491 = vmatmul.f32.gmra.mxu0 %v868
    %v1492 = vpop.f32.mrf.mxu0
    %v1493 = vadd.f32 %v1380, %v1492
    %1494 = vmatmul.f32.gmra.mxu0 %v872
    %v1495 = vpop.f32.mrf.mxu0
    %v1496 = vadd.f32 %v1383, %v1495
    %1497 = vmatmul.f32.gmra.mxu0 %v876
    %v1498 = vpop.f32.mrf.mxu0
    %v1499 = vadd.f32 %v1386, %v1498
    %1500 = vmatmul.f32.gmra.mxu0 %v880
    %v1501 = vpop.f32.mrf.mxu0
    %v1502 = vadd.f32 %v1389, %v1501
    %1503 = vmatmul.f32.gmra.mxu0 %v884
    %v1504 = vpop.f32.mrf.mxu0
    %v1505 = vadd.f32 %v1392, %v1504
    %1506 = vmatmul.f32.gmra.mxu0 %v888
    %v1507 = vpop.f32.mrf.mxu0
    %v1508 = vadd.f32 %v1395, %v1507
    %1509 = vmatmul.f32.gmra.mxu0 %v892
    %v1510 = vpop.f32.mrf.mxu0
    %v1511 = vadd.f32 %v1398, %v1510
    %1512 = vmatmul.f32.gmra.mxu0 %v896
    %v1513 = vpop.f32.mrf.mxu0
    %v1514 = vadd.f32 %v1401, %v1513
    %1515 = vmatmul.f32.gmra.mxu0 %v900
    %v1516 = vpop.f32.mrf.mxu0
    %v1517 = vadd.f32 %v1404, %v1516
    %1518 = vmatmul.f32.gmra.mxu0 %v904
    %v1519 = vpop.f32.mrf.mxu0
    %v1520 = vadd.f32 %v1407, %v1519
    %1521 = vmatmul.f32.gmra.mxu0 %v908
    %v1522 = vpop.f32.mrf.mxu0
    %v1523 = vadd.f32 %v1410, %v1522
    %1524 = vmatmul.f32.gmra.mxu0 %v912
    %v1525 = vpop.f32.mrf.mxu0
    %v1526 = vadd.f32 %v1413, %v1525
    %1527 = vmatmul.f32.gmra.mxu0 %v916
    %v1528 = vpop.f32.mrf.mxu0
    %v1529 = vadd.f32 %v1416, %v1528
    %1530 = vmatmul.f32.gmra.mxu0 %v920
    %v1531 = vpop.f32.mrf.mxu0
    %v1532 = vadd.f32 %v1419, %v1531
    %1533 = vmatmul.f32.gmra.mxu0 %v924
    %v1534 = vpop.f32.mrf.mxu0
    %v1535 = vadd.f32 %v1422, %v1534
    %1536 = vdwg.mxu0
    %1537 = vmatpush.xpose.msra.mxu0 %v861
    %1538 = vmatpush.xpose.msra.mxu0 %v857
    %1539 = vmatpush.xpose.msra.mxu0 %v853
    %1540 = vmatpush.xpose.msra.mxu0 %v849
    %1541 = vmatpush.xpose.msra.mxu0 %v845
    %1542 = vmatpush.xpose.msra.mxu0 %v841
    %1543 = vmatpush.xpose.msra.mxu0 %v837
    %1544 = vmatpush.xpose.msra.mxu0 %v833
    %1545 = vmatpush.xpose.msra.mxu0 %v829
    %1546 = vmatpush.xpose.msra.mxu0 %v825
    %1547 = vmatpush.xpose.msra.mxu0 %v821
    %1548 = vmatpush.xpose.msra.mxu0 %v817
    %1549 = vmatpush.xpose.msra.mxu0 %v813
    %1550 = vmatpush.xpose.msra.mxu0 %v809
    %1551 = vmatpush.xpose.msra.mxu0 %v805
    %1552 = vmatpush.xpose.msra.mxu0 %v801
    %1553 = vmatmul.f32.gmra.mxu0 %v801
    %v1554 = vpop.f32.mrf.mxu0
    %v1555 = vadd.f32 %v1442, %v1554
    %1556 = vmatmul.f32.gmra.mxu0 %v805
    %v1557 = vpop.f32.mrf.mxu0
    %v1558 = vadd.f32 %v1445, %v1557
    %1559 = vmatmul.f32.gmra.mxu0 %v809
    %v1560 = vpop.f32.mrf.mxu0
    %v1561 = vadd.f32 %v1448, %v1560
    %1562 = vmatmul.f32.gmra.mxu0 %v813
    %v1563 = vpop.f32.mrf.mxu0
    %v1564 = vadd.f32 %v1451, %v1563
    %1565 = vmatmul.f32.gmra.mxu0 %v817
    %v1566 = vpop.f32.mrf.mxu0
    %v1567 = vadd.f32 %v1454, %v1566
    %1568 = vmatmul.f32.gmra.mxu0 %v821
    %v1569 = vpop.f32.mrf.mxu0
    %v1570 = vadd.f32 %v1457, %v1569
    %1571 = vmatmul.f32.gmra.mxu0 %v825
    %v1572 = vpop.f32.mrf.mxu0
    %v1573 = vadd.f32 %v1460, %v1572
    %1574 = vmatmul.f32.gmra.mxu0 %v829
    %v1575 = vpop.f32.mrf.mxu0
    %v1576 = vadd.f32 %v1463, %v1575
    %1577 = vmatmul.f32.gmra.mxu0 %v833
    %v1578 = vpop.f32.mrf.mxu0
    %v1579 = vadd.f32 %v1466, %v1578
    %1580 = vmatmul.f32.gmra.mxu0 %v837
    %v1581 = vpop.f32.mrf.mxu0
    %v1582 = vadd.f32 %v1469, %v1581
    %1583 = vmatmul.f32.gmra.mxu0 %v841
    %v1584 = vpop.f32.mrf.mxu0
    %v1585 = vadd.f32 %v1472, %v1584
    %1586 = vmatmul.f32.gmra.mxu0 %v845
    %v1587 = vpop.f32.mrf.mxu0
    %v1588 = vadd.f32 %v1475, %v1587
    %1589 = vmatmul.f32.gmra.mxu0 %v849
    %v1590 = vpop.f32.mrf.mxu0
    %v1591 = vadd.f32 %v1478, %v1590
    %1592 = vmatmul.f32.gmra.mxu0 %v853
    %v1593 = vpop.f32.mrf.mxu0
    %v1594 = vadd.f32 %v1481, %v1593
    %1595 = vmatmul.f32.gmra.mxu0 %v857
    %v1596 = vpop.f32.mrf.mxu0
    %v1597 = vadd.f32 %v1484, %v1596
    %1598 = vmatmul.f32.gmra.mxu0 %v861
    %v1599 = vpop.f32.mrf.mxu0
    %v1600 = vadd.f32 %v1487, %v1599
    %1601 = vmatmul.f32.gmra.mxu0 %v865
    %v1602 = vpop.f32.mrf.mxu0
    %v1603 = vadd.f32 %v1490, %v1602
    %1604 = vmatmul.f32.gmra.mxu0 %v869
    %v1605 = vpop.f32.mrf.mxu0
    %v1606 = vadd.f32 %v1493, %v1605
    %1607 = vmatmul.f32.gmra.mxu0 %v873
    %v1608 = vpop.f32.mrf.mxu0
    %v1609 = vadd.f32 %v1496, %v1608
    %1610 = vmatmul.f32.gmra.mxu0 %v877
    %v1611 = vpop.f32.mrf.mxu0
    %v1612 = vadd.f32 %v1499, %v1611
    %1613 = vmatmul.f32.gmra.mxu0 %v881
    %v1614 = vpop.f32.mrf.mxu0
    %v1615 = vadd.f32 %v1502, %v1614
    %1616 = vmatmul.f32.gmra.mxu0 %v885
    %v1617 = vpop.f32.mrf.mxu0
    %v1618 = vadd.f32 %v1505, %v1617
    %1619 = vmatmul.f32.gmra.mxu0 %v889
    %v1620 = vpop.f32.mrf.mxu0
    %v1621 = vadd.f32 %v1508, %v1620
    %1622 = vmatmul.f32.gmra.mxu0 %v893
    %v1623 = vpop.f32.mrf.mxu0
    %v1624 = vadd.f32 %v1511, %v1623
    %1625 = vmatmul.f32.gmra.mxu0 %v897
    %v1626 = vpop.f32.mrf.mxu0
    %v1627 = vadd.f32 %v1514, %v1626
    %1628 = vmatmul.f32.gmra.mxu0 %v901
    %v1629 = vpop.f32.mrf.mxu0
    %v1630 = vadd.f32 %v1517, %v1629
    %1631 = vmatmul.f32.gmra.mxu0 %v905
    %v1632 = vpop.f32.mrf.mxu0
    %v1633 = vadd.f32 %v1520, %v1632
    %1634 = vmatmul.f32.gmra.mxu0 %v909
    %v1635 = vpop.f32.mrf.mxu0
    %v1636 = vadd.f32 %v1523, %v1635
    %1637 = vmatmul.f32.gmra.mxu0 %v913
    %v1638 = vpop.f32.mrf.mxu0
    %v1639 = vadd.f32 %v1526, %v1638
    %1640 = vmatmul.f32.gmra.mxu0 %v917
    %v1641 = vpop.f32.mrf.mxu0
    %v1642 = vadd.f32 %v1529, %v1641
    %1643 = vmatmul.f32.gmra.mxu0 %v921
    %v1644 = vpop.f32.mrf.mxu0
    %v1645 = vadd.f32 %v1532, %v1644
    %1646 = vmatmul.f32.gmra.mxu0 %v925
    %v1647 = vpop.f32.mrf.mxu0
    %v1648 = vadd.f32 %v1535, %v1647
    %1649 = vdwg.mxu0
    %1650 = vmatpush.xpose.msra.mxu0 %v862
    %1651 = vmatpush.xpose.msra.mxu0 %v858
    %1652 = vmatpush.xpose.msra.mxu0 %v854
    %1653 = vmatpush.xpose.msra.mxu0 %v850
    %1654 = vmatpush.xpose.msra.mxu0 %v846
    %1655 = vmatpush.xpose.msra.mxu0 %v842
    %1656 = vmatpush.xpose.msra.mxu0 %v838
    %1657 = vmatpush.xpose.msra.mxu0 %v834
    %1658 = vmatpush.xpose.msra.mxu0 %v830
    %1659 = vmatpush.xpose.msra.mxu0 %v826
    %1660 = vmatpush.xpose.msra.mxu0 %v822
    %1661 = vmatpush.xpose.msra.mxu0 %v818
    %1662 = vmatpush.xpose.msra.mxu0 %v814
    %1663 = vmatpush.xpose.msra.mxu0 %v810
    %1664 = vmatpush.xpose.msra.mxu0 %v806
    %1665 = vmatpush.xpose.msra.mxu0 %v802
    %1666 = vmatmul.f32.gmra.mxu0 %v802
    %v1667 = vpop.f32.mrf.mxu0
    %v1668 = vadd.f32 %v1555, %v1667
    %1669 = vmatmul.f32.gmra.mxu0 %v806
    %v1670 = vpop.f32.mrf.mxu0
    %v1671 = vadd.f32 %v1558, %v1670
    %1672 = vmatmul.f32.gmra.mxu0 %v810
    %v1673 = vpop.f32.mrf.mxu0
    %v1674 = vadd.f32 %v1561, %v1673
    %1675 = vmatmul.f32.gmra.mxu0 %v814
    %v1676 = vpop.f32.mrf.mxu0
    %v1677 = vadd.f32 %v1564, %v1676
    %1678 = vmatmul.f32.gmra.mxu0 %v818
    %v1679 = vpop.f32.mrf.mxu0
    %v1680 = vadd.f32 %v1567, %v1679
    %1681 = vmatmul.f32.gmra.mxu0 %v822
    %v1682 = vpop.f32.mrf.mxu0
    %v1683 = vadd.f32 %v1570, %v1682
    %1684 = vmatmul.f32.gmra.mxu0 %v826
    %v1685 = vpop.f32.mrf.mxu0
    %v1686 = vadd.f32 %v1573, %v1685
    %1687 = vmatmul.f32.gmra.mxu0 %v830
    %v1688 = vpop.f32.mrf.mxu0
    %v1689 = vadd.f32 %v1576, %v1688
    %1690 = vmatmul.f32.gmra.mxu0 %v834
    %v1691 = vpop.f32.mrf.mxu0
    %v1692 = vadd.f32 %v1579, %v1691
    %1693 = vmatmul.f32.gmra.mxu0 %v838
    %v1694 = vpop.f32.mrf.mxu0
    %v1695 = vadd.f32 %v1582, %v1694
    %1696 = vmatmul.f32.gmra.mxu0 %v842
    %v1697 = vpop.f32.mrf.mxu0
    %v1698 = vadd.f32 %v1585, %v1697
    %1699 = vmatmul.f32.gmra.mxu0 %v846
    %v1700 = vpop.f32.mrf.mxu0
    %v1701 = vadd.f32 %v1588, %v1700
    %1702 = vmatmul.f32.gmra.mxu0 %v850
    %v1703 = vpop.f32.mrf.mxu0
    %v1704 = vadd.f32 %v1591, %v1703
    %1705 = vmatmul.f32.gmra.mxu0 %v854
    %v1706 = vpop.f32.mrf.mxu0
    %v1707 = vadd.f32 %v1594, %v1706
    %1708 = vmatmul.f32.gmra.mxu0 %v858
    %v1709 = vpop.f32.mrf.mxu0
    %v1710 = vadd.f32 %v1597, %v1709
    %1711 = vmatmul.f32.gmra.mxu0 %v862
    %v1712 = vpop.f32.mrf.mxu0
    %v1713 = vadd.f32 %v1600, %v1712
    %1714 = vmatmul.f32.gmra.mxu0 %v866
    %v1715 = vpop.f32.mrf.mxu0
    %v1716 = vadd.f32 %v1603, %v1715
    %1717 = vmatmul.f32.gmra.mxu0 %v870
    %v1718 = vpop.f32.mrf.mxu0
    %v1719 = vadd.f32 %v1606, %v1718
    %1720 = vmatmul.f32.gmra.mxu0 %v874
    %v1721 = vpop.f32.mrf.mxu0
    %v1722 = vadd.f32 %v1609, %v1721
    %1723 = vmatmul.f32.gmra.mxu0 %v878
    %v1724 = vpop.f32.mrf.mxu0
    %v1725 = vadd.f32 %v1612, %v1724
    %1726 = vmatmul.f32.gmra.mxu0 %v882
    %v1727 = vpop.f32.mrf.mxu0
    %v1728 = vadd.f32 %v1615, %v1727
    %1729 = vmatmul.f32.gmra.mxu0 %v886
    %v1730 = vpop.f32.mrf.mxu0
    %v1731 = vadd.f32 %v1618, %v1730
    %1732 = vmatmul.f32.gmra.mxu0 %v890
    %v1733 = vpop.f32.mrf.mxu0
    %v1734 = vadd.f32 %v1621, %v1733
    %1735 = vmatmul.f32.gmra.mxu0 %v894
    %v1736 = vpop.f32.mrf.mxu0
    %v1737 = vadd.f32 %v1624, %v1736
    %1738 = vmatmul.f32.gmra.mxu0 %v898
    %v1739 = vpop.f32.mrf.mxu0
    %v1740 = vadd.f32 %v1627, %v1739
    %1741 = vmatmul.f32.gmra.mxu0 %v902
    %v1742 = vpop.f32.mrf.mxu0
    %v1743 = vadd.f32 %v1630, %v1742
    %1744 = vmatmul.f32.gmra.mxu0 %v906
    %v1745 = vpop.f32.mrf.mxu0
    %v1746 = vadd.f32 %v1633, %v1745
    %1747 = vmatmul.f32.gmra.mxu0 %v910
    %v1748 = vpop.f32.mrf.mxu0
    %v1749 = vadd.f32 %v1636, %v1748
    %1750 = vmatmul.f32.gmra.mxu0 %v914
    %v1751 = vpop.f32.mrf.mxu0
    %v1752 = vadd.f32 %v1639, %v1751
    %1753 = vmatmul.f32.gmra.mxu0 %v918
    %v1754 = vpop.f32.mrf.mxu0
    %v1755 = vadd.f32 %v1642, %v1754
    %1756 = vmatmul.f32.gmra.mxu0 %v922
    %v1757 = vpop.f32.mrf.mxu0
    %v1758 = vadd.f32 %v1645, %v1757
    %1759 = vmatmul.f32.gmra.mxu0 %v926
    %v1760 = vpop.f32.mrf.mxu0
    %v1761 = vadd.f32 %v1648, %v1760
    %1762 = vdwg.mxu0
    %1763 = vmatpush.xpose.msra.mxu0 %v923
    %1764 = vmatpush.xpose.msra.mxu0 %v919
    %1765 = vmatpush.xpose.msra.mxu0 %v915
    %1766 = vmatpush.xpose.msra.mxu0 %v911
    %1767 = vmatpush.xpose.msra.mxu0 %v907
    %1768 = vmatpush.xpose.msra.mxu0 %v903
    %1769 = vmatpush.xpose.msra.mxu0 %v899
    %1770 = vmatpush.xpose.msra.mxu0 %v895
    %1771 = vmatpush.xpose.msra.mxu0 %v891
    %1772 = vmatpush.xpose.msra.mxu0 %v887
    %1773 = vmatpush.xpose.msra.mxu0 %v883
    %1774 = vmatpush.xpose.msra.mxu0 %v879
    %1775 = vmatpush.xpose.msra.mxu0 %v875
    %1776 = vmatpush.xpose.msra.mxu0 %v871
    %1777 = vmatpush.xpose.msra.mxu0 %v867
    %1778 = vmatpush.xpose.msra.mxu0 %v863
    %1779 = vmatmul.f32.gmra.mxu0 %v799
    %v1780 = vpop.f32.mrf.mxu0
    %v1781 = vadd.f32 0.0, %v1780
    %1782 = vmatmul.f32.gmra.mxu0 %v803
    %v1783 = vpop.f32.mrf.mxu0
    %v1784 = vadd.f32 0.0, %v1783
    %1785 = vmatmul.f32.gmra.mxu0 %v807
    %v1786 = vpop.f32.mrf.mxu0
    %v1787 = vadd.f32 0.0, %v1786
    %1788 = vmatmul.f32.gmra.mxu0 %v811
    %v1789 = vpop.f32.mrf.mxu0
    %v1790 = vadd.f32 0.0, %v1789
    %1791 = vmatmul.f32.gmra.mxu0 %v815
    %v1792 = vpop.f32.mrf.mxu0
    %v1793 = vadd.f32 0.0, %v1792
    %1794 = vmatmul.f32.gmra.mxu0 %v819
    %v1795 = vpop.f32.mrf.mxu0
    %v1796 = vadd.f32 0.0, %v1795
    %1797 = vmatmul.f32.gmra.mxu0 %v823
    %v1798 = vpop.f32.mrf.mxu0
    %v1799 = vadd.f32 0.0, %v1798
    %1800 = vmatmul.f32.gmra.mxu0 %v827
    %v1801 = vpop.f32.mrf.mxu0
    %v1802 = vadd.f32 0.0, %v1801
    %1803 = vmatmul.f32.gmra.mxu0 %v831
    %v1804 = vpop.f32.mrf.mxu0
    %v1805 = vadd.f32 0.0, %v1804
    %1806 = vmatmul.f32.gmra.mxu0 %v835
    %v1807 = vpop.f32.mrf.mxu0
    %v1808 = vadd.f32 0.0, %v1807
    %1809 = vmatmul.f32.gmra.mxu0 %v839
    %v1810 = vpop.f32.mrf.mxu0
    %v1811 = vadd.f32 0.0, %v1810
    %1812 = vmatmul.f32.gmra.mxu0 %v843
    %v1813 = vpop.f32.mrf.mxu0
    %v1814 = vadd.f32 0.0, %v1813
    %1815 = vmatmul.f32.gmra.mxu0 %v847
    %v1816 = vpop.f32.mrf.mxu0
    %v1817 = vadd.f32 0.0, %v1816
    %1818 = vmatmul.f32.gmra.mxu0 %v851
    %v1819 = vpop.f32.mrf.mxu0
    %v1820 = vadd.f32 0.0, %v1819
    %1821 = vmatmul.f32.gmra.mxu0 %v855
    %v1822 = vpop.f32.mrf.mxu0
    %v1823 = vadd.f32 0.0, %v1822
    %1824 = vmatmul.f32.gmra.mxu0 %v859
    %v1825 = vpop.f32.mrf.mxu0
    %v1826 = vadd.f32 0.0, %v1825
    %1827 = vmatmul.f32.gmra.mxu0 %v863
    %v1828 = vpop.f32.mrf.mxu0
    %v1829 = vadd.f32 0.0, %v1828
    %1830 = vmatmul.f32.gmra.mxu0 %v867
    %v1831 = vpop.f32.mrf.mxu0
    %v1832 = vadd.f32 0.0, %v1831
    %1833 = vmatmul.f32.gmra.mxu0 %v871
    %v1834 = vpop.f32.mrf.mxu0
    %v1835 = vadd.f32 0.0, %v1834
    %1836 = vmatmul.f32.gmra.mxu0 %v875
    %v1837 = vpop.f32.mrf.mxu0
    %v1838 = vadd.f32 0.0, %v1837
    %1839 = vmatmul.f32.gmra.mxu0 %v879
    %v1840 = vpop.f32.mrf.mxu0
    %v1841 = vadd.f32 0.0, %v1840
    %1842 = vmatmul.f32.gmra.mxu0 %v883
    %v1843 = vpop.f32.mrf.mxu0
    %v1844 = vadd.f32 0.0, %v1843
    %1845 = vmatmul.f32.gmra.mxu0 %v887
    %v1846 = vpop.f32.mrf.mxu0
    %v1847 = vadd.f32 0.0, %v1846
    %1848 = vmatmul.f32.gmra.mxu0 %v891
    %v1849 = vpop.f32.mrf.mxu0
    %v1850 = vadd.f32 0.0, %v1849
    %1851 = vmatmul.f32.gmra.mxu0 %v895
    %v1852 = vpop.f32.mrf.mxu0
    %v1853 = vadd.f32 0.0, %v1852
    %1854 = vmatmul.f32.gmra.mxu0 %v899
    %v1855 = vpop.f32.mrf.mxu0
    %v1856 = vadd.f32 0.0, %v1855
    %1857 = vmatmul.f32.gmra.mxu0 %v903
    %v1858 = vpop.f32.mrf.mxu0
    %v1859 = vadd.f32 0.0, %v1858
    %1860 = vmatmul.f32.gmra.mxu0 %v907
    %v1861 = vpop.f32.mrf.mxu0
    %v1862 = vadd.f32 0.0, %v1861
    %1863 = vmatmul.f32.gmra.mxu0 %v911
    %v1864 = vpop.f32.mrf.mxu0
    %v1865 = vadd.f32 0.0, %v1864
    %1866 = vmatmul.f32.gmra.mxu0 %v915
    %v1867 = vpop.f32.mrf.mxu0
    %v1868 = vadd.f32 0.0, %v1867
    %1869 = vmatmul.f32.gmra.mxu0 %v919
    %v1870 = vpop.f32.mrf.mxu0
    %v1871 = vadd.f32 0.0, %v1870
    %1872 = vmatmul.f32.gmra.mxu0 %v923
    %v1873 = vpop.f32.mrf.mxu0
    %v1874 = vadd.f32 0.0, %v1873
    %1875 = vdwg.mxu0
    %1876 = vmatpush.xpose.msra.mxu0 %v924
    %1877 = vmatpush.xpose.msra.mxu0 %v920
    %1878 = vmatpush.xpose.msra.mxu0 %v916
    %1879 = vmatpush.xpose.msra.mxu0 %v912
    %1880 = vmatpush.xpose.msra.mxu0 %v908
    %1881 = vmatpush.xpose.msra.mxu0 %v904
    %1882 = vmatpush.xpose.msra.mxu0 %v900
    %1883 = vmatpush.xpose.msra.mxu0 %v896
    %1884 = vmatpush.xpose.msra.mxu0 %v892
    %1885 = vmatpush.xpose.msra.mxu0 %v888
    %1886 = vmatpush.xpose.msra.mxu0 %v884
    %1887 = vmatpush.xpose.msra.mxu0 %v880
    %1888 = vmatpush.xpose.msra.mxu0 %v876
    %1889 = vmatpush.xpose.msra.mxu0 %v872
    %1890 = vmatpush.xpose.msra.mxu0 %v868
    %1891 = vmatpush.xpose.msra.mxu0 %v864
    %1892 = vmatmul.f32.gmra.mxu0 %v800
    %v1893 = vpop.f32.mrf.mxu0
    %v1894 = vadd.f32 %v1781, %v1893
    %1895 = vmatmul.f32.gmra.mxu0 %v804
    %v1896 = vpop.f32.mrf.mxu0
    %v1897 = vadd.f32 %v1784, %v1896
    %1898 = vmatmul.f32.gmra.mxu0 %v808
    %v1899 = vpop.f32.mrf.mxu0
    %v1900 = vadd.f32 %v1787, %v1899
    %1901 = vmatmul.f32.gmra.mxu0 %v812
    %v1902 = vpop.f32.mrf.mxu0
    %v1903 = vadd.f32 %v1790, %v1902
    %1904 = vmatmul.f32.gmra.mxu0 %v816
    %v1905 = vpop.f32.mrf.mxu0
    %v1906 = vadd.f32 %v1793, %v1905
    %1907 = vmatmul.f32.gmra.mxu0 %v820
    %v1908 = vpop.f32.mrf.mxu0
    %v1909 = vadd.f32 %v1796, %v1908
    %1910 = vmatmul.f32.gmra.mxu0 %v824
    %v1911 = vpop.f32.mrf.mxu0
    %v1912 = vadd.f32 %v1799, %v1911
    %1913 = vmatmul.f32.gmra.mxu0 %v828
    %v1914 = vpop.f32.mrf.mxu0
    %v1915 = vadd.f32 %v1802, %v1914
    %1916 = vmatmul.f32.gmra.mxu0 %v832
    %v1917 = vpop.f32.mrf.mxu0
    %v1918 = vadd.f32 %v1805, %v1917
    %1919 = vmatmul.f32.gmra.mxu0 %v836
    %v1920 = vpop.f32.mrf.mxu0
    %v1921 = vadd.f32 %v1808, %v1920
    %1922 = vmatmul.f32.gmra.mxu0 %v840
    %v1923 = vpop.f32.mrf.mxu0
    %v1924 = vadd.f32 %v1811, %v1923
    %1925 = vmatmul.f32.gmra.mxu0 %v844
    %v1926 = vpop.f32.mrf.mxu0
    %v1927 = vadd.f32 %v1814, %v1926
    %1928 = vmatmul.f32.gmra.mxu0 %v848
    %v1929 = vpop.f32.mrf.mxu0
    %v1930 = vadd.f32 %v1817, %v1929
    %1931 = vmatmul.f32.gmra.mxu0 %v852
    %v1932 = vpop.f32.mrf.mxu0
    %v1933 = vadd.f32 %v1820, %v1932
    %1934 = vmatmul.f32.gmra.mxu0 %v856
    %v1935 = vpop.f32.mrf.mxu0
    %v1936 = vadd.f32 %v1823, %v1935
    %1937 = vmatmul.f32.gmra.mxu0 %v860
    %v1938 = vpop.f32.mrf.mxu0
    %v1939 = vadd.f32 %v1826, %v1938
    %1940 = vmatmul.f32.gmra.mxu0 %v864
    %v1941 = vpop.f32.mrf.mxu0
    %v1942 = vadd.f32 %v1829, %v1941
    %1943 = vmatmul.f32.gmra.mxu0 %v868
    %v1944 = vpop.f32.mrf.mxu0
    %v1945 = vadd.f32 %v1832, %v1944
    %1946 = vmatmul.f32.gmra.mxu0 %v872
    %v1947 = vpop.f32.mrf.mxu0
    %v1948 = vadd.f32 %v1835, %v1947
    %1949 = vmatmul.f32.gmra.mxu0 %v876
    %v1950 = vpop.f32.mrf.mxu0
    %v1951 = vadd.f32 %v1838, %v1950
    %1952 = vmatmul.f32.gmra.mxu0 %v880
    %v1953 = vpop.f32.mrf.mxu0
    %v1954 = vadd.f32 %v1841, %v1953
    %1955 = vmatmul.f32.gmra.mxu0 %v884
    %v1956 = vpop.f32.mrf.mxu0
    %v1957 = vadd.f32 %v1844, %v1956
    %1958 = vmatmul.f32.gmra.mxu0 %v888
    %v1959 = vpop.f32.mrf.mxu0
    %v1960 = vadd.f32 %v1847, %v1959
    %1961 = vmatmul.f32.gmra.mxu0 %v892
    %v1962 = vpop.f32.mrf.mxu0
    %v1963 = vadd.f32 %v1850, %v1962
    %1964 = vmatmul.f32.gmra.mxu0 %v896
    %v1965 = vpop.f32.mrf.mxu0
    %v1966 = vadd.f32 %v1853, %v1965
    %1967 = vmatmul.f32.gmra.mxu0 %v900
    %v1968 = vpop.f32.mrf.mxu0
    %v1969 = vadd.f32 %v1856, %v1968
    %1970 = vmatmul.f32.gmra.mxu0 %v904
    %v1971 = vpop.f32.mrf.mxu0
    %v1972 = vadd.f32 %v1859, %v1971
    %1973 = vmatmul.f32.gmra.mxu0 %v908
    %v1974 = vpop.f32.mrf.mxu0
    %v1975 = vadd.f32 %v1862, %v1974
    %1976 = vmatmul.f32.gmra.mxu0 %v912
    %v1977 = vpop.f32.mrf.mxu0
    %v1978 = vadd.f32 %v1865, %v1977
    %1979 = vmatmul.f32.gmra.mxu0 %v916
    %v1980 = vpop.f32.mrf.mxu0
    %v1981 = vadd.f32 %v1868, %v1980
    %1982 = vmatmul.f32.gmra.mxu0 %v920
    %v1983 = vpop.f32.mrf.mxu0
    %v1984 = vadd.f32 %v1871, %v1983
    %1985 = vmatmul.f32.gmra.mxu0 %v924
    %v1986 = vpop.f32.mrf.mxu0
    %v1987 = vadd.f32 %v1874, %v1986
    %1988 = vdwg.mxu0
    %1989 = vmatpush.xpose.msra.mxu0 %v925
    %1990 = vmatpush.xpose.msra.mxu0 %v921
    %1991 = vmatpush.xpose.msra.mxu0 %v917
    %1992 = vmatpush.xpose.msra.mxu0 %v913
    %1993 = vmatpush.xpose.msra.mxu0 %v909
    %1994 = vmatpush.xpose.msra.mxu0 %v905
    %1995 = vmatpush.xpose.msra.mxu0 %v901
    %1996 = vmatpush.xpose.msra.mxu0 %v897
    %1997 = vmatpush.xpose.msra.mxu0 %v893
    %1998 = vmatpush.xpose.msra.mxu0 %v889
    %1999 = vmatpush.xpose.msra.mxu0 %v885
    %2000 = vmatpush.xpose.msra.mxu0 %v881
    %2001 = vmatpush.xpose.msra.mxu0 %v877
    %2002 = vmatpush.xpose.msra.mxu0 %v873
    %2003 = vmatpush.xpose.msra.mxu0 %v869
    %2004 = vmatpush.xpose.msra.mxu0 %v865
    %2005 = vmatmul.f32.gmra.mxu0 %v801
    %v2006 = vpop.f32.mrf.mxu0
    %v2007 = vadd.f32 %v1894, %v2006
    %2008 = vmatmul.f32.gmra.mxu0 %v805
    %v2009 = vpop.f32.mrf.mxu0
    %v2010 = vadd.f32 %v1897, %v2009
    %2011 = vmatmul.f32.gmra.mxu0 %v809
    %v2012 = vpop.f32.mrf.mxu0
    %v2013 = vadd.f32 %v1900, %v2012
    %2014 = vmatmul.f32.gmra.mxu0 %v813
    %v2015 = vpop.f32.mrf.mxu0
    %v2016 = vadd.f32 %v1903, %v2015
    %2017 = vmatmul.f32.gmra.mxu0 %v817
    %v2018 = vpop.f32.mrf.mxu0
    %v2019 = vadd.f32 %v1906, %v2018
    %2020 = vmatmul.f32.gmra.mxu0 %v821
    %v2021 = vpop.f32.mrf.mxu0
    %v2022 = vadd.f32 %v1909, %v2021
    %2023 = vmatmul.f32.gmra.mxu0 %v825
    %v2024 = vpop.f32.mrf.mxu0
    %v2025 = vadd.f32 %v1912, %v2024
    %2026 = vmatmul.f32.gmra.mxu0 %v829
    %v2027 = vpop.f32.mrf.mxu0
    %v2028 = vadd.f32 %v1915, %v2027
    %2029 = vmatmul.f32.gmra.mxu0 %v833
    %v2030 = vpop.f32.mrf.mxu0
    %v2031 = vadd.f32 %v1918, %v2030
    %2032 = vmatmul.f32.gmra.mxu0 %v837
    %v2033 = vpop.f32.mrf.mxu0
    %v2034 = vadd.f32 %v1921, %v2033
    %2035 = vmatmul.f32.gmra.mxu0 %v841
    %v2036 = vpop.f32.mrf.mxu0
    %v2037 = vadd.f32 %v1924, %v2036
    %2038 = vmatmul.f32.gmra.mxu0 %v845
    %v2039 = vpop.f32.mrf.mxu0
    %v2040 = vadd.f32 %v1927, %v2039
    %2041 = vmatmul.f32.gmra.mxu0 %v849
    %v2042 = vpop.f32.mrf.mxu0
    %v2043 = vadd.f32 %v1930, %v2042
    %2044 = vmatmul.f32.gmra.mxu0 %v853
    %v2045 = vpop.f32.mrf.mxu0
    %v2046 = vadd.f32 %v1933, %v2045
    %2047 = vmatmul.f32.gmra.mxu0 %v857
    %v2048 = vpop.f32.mrf.mxu0
    %v2049 = vadd.f32 %v1936, %v2048
    %2050 = vmatmul.f32.gmra.mxu0 %v861
    %v2051 = vpop.f32.mrf.mxu0
    %v2052 = vadd.f32 %v1939, %v2051
    %2053 = vmatmul.f32.gmra.mxu0 %v865
    %v2054 = vpop.f32.mrf.mxu0
    %v2055 = vadd.f32 %v1942, %v2054
    %2056 = vmatmul.f32.gmra.mxu0 %v869
    %v2057 = vpop.f32.mrf.mxu0
    %v2058 = vadd.f32 %v1945, %v2057
    %2059 = vmatmul.f32.gmra.mxu0 %v873
    %v2060 = vpop.f32.mrf.mxu0
    %v2061 = vadd.f32 %v1948, %v2060
    %2062 = vmatmul.f32.gmra.mxu0 %v877
    %v2063 = vpop.f32.mrf.mxu0
    %v2064 = vadd.f32 %v1951, %v2063
    %2065 = vmatmul.f32.gmra.mxu0 %v881
    %v2066 = vpop.f32.mrf.mxu0
    %v2067 = vadd.f32 %v1954, %v2066
    %2068 = vmatmul.f32.gmra.mxu0 %v885
    %v2069 = vpop.f32.mrf.mxu0
    %v2070 = vadd.f32 %v1957, %v2069
    %2071 = vmatmul.f32.gmra.mxu0 %v889
    %v2072 = vpop.f32.mrf.mxu0
    %v2073 = vadd.f32 %v1960, %v2072
    %2074 = vmatmul.f32.gmra.mxu0 %v893
    %v2075 = vpop.f32.mrf.mxu0
    %v2076 = vadd.f32 %v1963, %v2075
    %2077 = vmatmul.f32.gmra.mxu0 %v897
    %v2078 = vpop.f32.mrf.mxu0
    %v2079 = vadd.f32 %v1966, %v2078
    %2080 = vmatmul.f32.gmra.mxu0 %v901
    %v2081 = vpop.f32.mrf.mxu0
    %v2082 = vadd.f32 %v1969, %v2081
    %2083 = vmatmul.f32.gmra.mxu0 %v905
    %v2084 = vpop.f32.mrf.mxu0
    %v2085 = vadd.f32 %v1972, %v2084
    %2086 = vmatmul.f32.gmra.mxu0 %v909
    %v2087 = vpop.f32.mrf.mxu0
    %v2088 = vadd.f32 %v1975, %v2087
    %2089 = vmatmul.f32.gmra.mxu0 %v913
    %v2090 = vpop.f32.mrf.mxu0
    %v2091 = vadd.f32 %v1978, %v2090
    %2092 = vmatmul.f32.gmra.mxu0 %v917
    %v2093 = vpop.f32.mrf.mxu0
    %v2094 = vadd.f32 %v1981, %v2093
    %2095 = vmatmul.f32.gmra.mxu0 %v921
    %v2096 = vpop.f32.mrf.mxu0
    %v2097 = vadd.f32 %v1984, %v2096
    %2098 = vmatmul.f32.gmra.mxu0 %v925
    %v2099 = vpop.f32.mrf.mxu0
    %v2100 = vadd.f32 %v1987, %v2099
    %2101 = vdwg.mxu0
    %2102 = vmatpush.xpose.msra.mxu0 %v926
    %2103 = vmatpush.xpose.msra.mxu0 %v922
    %2104 = vmatpush.xpose.msra.mxu0 %v918
    %2105 = vmatpush.xpose.msra.mxu0 %v914
    %2106 = vmatpush.xpose.msra.mxu0 %v910
    %2107 = vmatpush.xpose.msra.mxu0 %v906
    %2108 = vmatpush.xpose.msra.mxu0 %v902
    %2109 = vmatpush.xpose.msra.mxu0 %v898
    %2110 = vmatpush.xpose.msra.mxu0 %v894
    %2111 = vmatpush.xpose.msra.mxu0 %v890
    %2112 = vmatpush.xpose.msra.mxu0 %v886
    %2113 = vmatpush.xpose.msra.mxu0 %v882
    %2114 = vmatpush.xpose.msra.mxu0 %v878
    %2115 = vmatpush.xpose.msra.mxu0 %v874
    %2116 = vmatpush.xpose.msra.mxu0 %v870
    %2117 = vmatpush.xpose.msra.mxu0 %v866
    %2118 = vmatmul.f32.gmra.mxu0 %v802
    %v2119 = vpop.f32.mrf.mxu0
    %v2120 = vadd.f32 %v2007, %v2119
    %2121 = vmatmul.f32.gmra.mxu0 %v806
    %v2122 = vpop.f32.mrf.mxu0
    %v2123 = vadd.f32 %v2010, %v2122
    %2124 = vmatmul.f32.gmra.mxu0 %v810
    %v2125 = vpop.f32.mrf.mxu0
    %v2126 = vadd.f32 %v2013, %v2125
    %2127 = vmatmul.f32.gmra.mxu0 %v814
    %v2128 = vpop.f32.mrf.mxu0
    %v2129 = vadd.f32 %v2016, %v2128
    %2130 = vmatmul.f32.gmra.mxu0 %v818
    %v2131 = vpop.f32.mrf.mxu0
    %v2132 = vadd.f32 %v2019, %v2131
    %2133 = vmatmul.f32.gmra.mxu0 %v822
    %v2134 = vpop.f32.mrf.mxu0
    %v2135 = vadd.f32 %v2022, %v2134
    %2136 = vmatmul.f32.gmra.mxu0 %v826
    %v2137 = vpop.f32.mrf.mxu0
    %v2138 = vadd.f32 %v2025, %v2137
    %2139 = vmatmul.f32.gmra.mxu0 %v830
    %v2140 = vpop.f32.mrf.mxu0
    %v2141 = vadd.f32 %v2028, %v2140
    %2142 = vmatmul.f32.gmra.mxu0 %v834
    %v2143 = vpop.f32.mrf.mxu0
    %v2144 = vadd.f32 %v2031, %v2143
    %2145 = vmatmul.f32.gmra.mxu0 %v838
    %v2146 = vpop.f32.mrf.mxu0
    %v2147 = vadd.f32 %v2034, %v2146
    %2148 = vmatmul.f32.gmra.mxu0 %v842
    %v2149 = vpop.f32.mrf.mxu0
    %v2150 = vadd.f32 %v2037, %v2149
    %2151 = vmatmul.f32.gmra.mxu0 %v846
    %v2152 = vpop.f32.mrf.mxu0
    %v2153 = vadd.f32 %v2040, %v2152
    %2154 = vmatmul.f32.gmra.mxu0 %v850
    %v2155 = vpop.f32.mrf.mxu0
    %v2156 = vadd.f32 %v2043, %v2155
    %2157 = vmatmul.f32.gmra.mxu0 %v854
    %v2158 = vpop.f32.mrf.mxu0
    %v2159 = vadd.f32 %v2046, %v2158
    %2160 = vmatmul.f32.gmra.mxu0 %v858
    %v2161 = vpop.f32.mrf.mxu0
    %v2162 = vadd.f32 %v2049, %v2161
    %2163 = vmatmul.f32.gmra.mxu0 %v862
    %v2164 = vpop.f32.mrf.mxu0
    %v2165 = vadd.f32 %v2052, %v2164
    %2166 = vmatmul.f32.gmra.mxu0 %v866
    %v2167 = vpop.f32.mrf.mxu0
    %v2168 = vadd.f32 %v2055, %v2167
    %2169 = vmatmul.f32.gmra.mxu0 %v870
    %v2170 = vpop.f32.mrf.mxu0
    %v2171 = vadd.f32 %v2058, %v2170
    %2172 = vmatmul.f32.gmra.mxu0 %v874
    %v2173 = vpop.f32.mrf.mxu0
    %v2174 = vadd.f32 %v2061, %v2173
    %2175 = vmatmul.f32.gmra.mxu0 %v878
    %v2176 = vpop.f32.mrf.mxu0
    %v2177 = vadd.f32 %v2064, %v2176
    %2178 = vmatmul.f32.gmra.mxu0 %v882
    %v2179 = vpop.f32.mrf.mxu0
    %v2180 = vadd.f32 %v2067, %v2179
    %2181 = vmatmul.f32.gmra.mxu0 %v886
    %v2182 = vpop.f32.mrf.mxu0
    %v2183 = vadd.f32 %v2070, %v2182
    %2184 = vmatmul.f32.gmra.mxu0 %v890
    %v2185 = vpop.f32.mrf.mxu0
    %v2186 = vadd.f32 %v2073, %v2185
    %2187 = vmatmul.f32.gmra.mxu0 %v894
    %v2188 = vpop.f32.mrf.mxu0
    %v2189 = vadd.f32 %v2076, %v2188
    %2190 = vmatmul.f32.gmra.mxu0 %v898
    %v2191 = vpop.f32.mrf.mxu0
    %v2192 = vadd.f32 %v2079, %v2191
    %2193 = vmatmul.f32.gmra.mxu0 %v902
    %v2194 = vpop.f32.mrf.mxu0
    %v2195 = vadd.f32 %v2082, %v2194
    %2196 = vmatmul.f32.gmra.mxu0 %v906
    %v2197 = vpop.f32.mrf.mxu0
    %v2198 = vadd.f32 %v2085, %v2197
    %2199 = vmatmul.f32.gmra.mxu0 %v910
    %v2200 = vpop.f32.mrf.mxu0
    %v2201 = vadd.f32 %v2088, %v2200
    %2202 = vmatmul.f32.gmra.mxu0 %v914
    %v2203 = vpop.f32.mrf.mxu0
    %v2204 = vadd.f32 %v2091, %v2203
    %2205 = vmatmul.f32.gmra.mxu0 %v918
    %v2206 = vpop.f32.mrf.mxu0
    %v2207 = vadd.f32 %v2094, %v2206
    %2208 = vmatmul.f32.gmra.mxu0 %v922
    %v2209 = vpop.f32.mrf.mxu0
    %v2210 = vadd.f32 %v2097, %v2209
    %2211 = vmatmul.f32.gmra.mxu0 %v926
    %v2212 = vpop.f32.mrf.mxu0
    %v2213 = vadd.f32 %v2100, %v2212
    %2214 = vdwg.mxu0
    %v2215 = vmul.f32 %v1668, 2.0
    %v2216 = vmul.f32 %v2120, 2.0
    %v2217 = vmul.f32 %v1671, 2.0
    %v2218 = vmul.f32 %v2123, 2.0
    %v2219 = vmul.f32 %v1674, 2.0
    %v2220 = vmul.f32 %v2126, 2.0
    %v2221 = vmul.f32 %v1677, 2.0
    %v2222 = vmul.f32 %v2129, 2.0
    %v2223 = vmul.f32 %v1680, 2.0
    %v2224 = vmul.f32 %v2132, 2.0
    %v2225 = vmul.f32 %v1683, 2.0
    %v2226 = vmul.f32 %v2135, 2.0
    %v2227 = vmul.f32 %v1686, 2.0
    %v2228 = vmul.f32 %v2138, 2.0
    %v2229 = vmul.f32 %v1689, 2.0
    %v2230 = vmul.f32 %v2141, 2.0
    %v2231 = vmul.f32 %v1692, 2.0
    %v2232 = vmul.f32 %v2144, 2.0
    %v2233 = vmul.f32 %v1695, 2.0
    %v2234 = vmul.f32 %v2147, 2.0
    %v2235 = vmul.f32 %v1698, 2.0
    %v2236 = vmul.f32 %v2150, 2.0
    %v2237 = vmul.f32 %v1701, 2.0
    %v2238 = vmul.f32 %v2153, 2.0
    %v2239 = vmul.f32 %v1704, 2.0
    %v2240 = vmul.f32 %v2156, 2.0
    %v2241 = vmul.f32 %v1707, 2.0
    %v2242 = vmul.f32 %v2159, 2.0
    %v2243 = vmul.f32 %v1710, 2.0
    %v2244 = vmul.f32 %v2162, 2.0
    %v2245 = vmul.f32 %v1713, 2.0
    %v2246 = vmul.f32 %v2165, 2.0
    %v2247 = vmul.f32 %v1716, 2.0
    %v2248 = vmul.f32 %v2168, 2.0
    %v2249 = vmul.f32 %v1719, 2.0
    %v2250 = vmul.f32 %v2171, 2.0
    %v2251 = vmul.f32 %v1722, 2.0
    %v2252 = vmul.f32 %v2174, 2.0
    %v2253 = vmul.f32 %v1725, 2.0
    %v2254 = vmul.f32 %v2177, 2.0
    %v2255 = vmul.f32 %v1728, 2.0
    %v2256 = vmul.f32 %v2180, 2.0
    %v2257 = vmul.f32 %v1731, 2.0
    %v2258 = vmul.f32 %v2183, 2.0
    %v2259 = vmul.f32 %v1734, 2.0
    %v2260 = vmul.f32 %v2186, 2.0
    %v2261 = vmul.f32 %v1737, 2.0
    %v2262 = vmul.f32 %v2189, 2.0
    %v2263 = vmul.f32 %v1740, 2.0
    %v2264 = vmul.f32 %v2192, 2.0
    %v2265 = vmul.f32 %v1743, 2.0
    %v2266 = vmul.f32 %v2195, 2.0
    %v2267 = vmul.f32 %v1746, 2.0
    %v2268 = vmul.f32 %v2198, 2.0
    %v2269 = vmul.f32 %v1749, 2.0
    %v2270 = vmul.f32 %v2201, 2.0
    %v2271 = vmul.f32 %v1752, 2.0
    %v2272 = vmul.f32 %v2204, 2.0
    %v2273 = vmul.f32 %v1755, 2.0
    %v2274 = vmul.f32 %v2207, 2.0
    %v2275 = vmul.f32 %v1758, 2.0
    %v2276 = vmul.f32 %v2210, 2.0
    %v2277 = vmul.f32 %v1761, 2.0
    %v2278 = vmul.f32 %v2213, 2.0
    %v2279 = vsub.f32 2.0, %v2215
    %v2280 = vsub.f32 2.0, %v2216
    %v2281 = vsub.f32 2.0, %v2217
    %v2282 = vsub.f32 2.0, %v2218
    %v2283 = vsub.f32 2.0, %v2219
    %v2284 = vsub.f32 2.0, %v2220
    %v2285 = vsub.f32 2.0, %v2221
    %v2286 = vsub.f32 2.0, %v2222
    %v2287 = vsub.f32 2.0, %v2223
    %v2288 = vsub.f32 2.0, %v2224
    %v2289 = vsub.f32 2.0, %v2225
    %v2290 = vsub.f32 2.0, %v2226
    %v2291 = vsub.f32 2.0, %v2227
    %v2292 = vsub.f32 2.0, %v2228
    %v2293 = vsub.f32 2.0, %v2229
    %v2294 = vsub.f32 2.0, %v2230
    %v2295 = vsub.f32 2.0, %v2231
    %v2296 = vsub.f32 2.0, %v2232
    %v2297 = vsub.f32 2.0, %v2233
    %v2298 = vsub.f32 2.0, %v2234
    %v2299 = vsub.f32 2.0, %v2235
    %v2300 = vsub.f32 2.0, %v2236
    %v2301 = vsub.f32 2.0, %v2237
    %v2302 = vsub.f32 2.0, %v2238
    %v2303 = vsub.f32 2.0, %v2239
    %v2304 = vsub.f32 2.0, %v2240
    %v2305 = vsub.f32 2.0, %v2241
    %v2306 = vsub.f32 2.0, %v2242
    %v2307 = vsub.f32 2.0, %v2243
    %v2308 = vsub.f32 2.0, %v2244
    %v2309 = vsub.f32 2.0, %v2245
    %v2310 = vsub.f32 2.0, %v2246
    %v2311 = vsub.f32 2.0, %v2247
    %v2312 = vsub.f32 2.0, %v2248
    %v2313 = vsub.f32 2.0, %v2249
    %v2314 = vsub.f32 2.0, %v2250
    %v2315 = vsub.f32 2.0, %v2251
    %v2316 = vsub.f32 2.0, %v2252
    %v2317 = vsub.f32 2.0, %v2253
    %v2318 = vsub.f32 2.0, %v2254
    %v2319 = vsub.f32 2.0, %v2255
    %v2320 = vsub.f32 2.0, %v2256
    %v2321 = vsub.f32 2.0, %v2257
    %v2322 = vsub.f32 2.0, %v2258
    %v2323 = vsub.f32 2.0, %v2259
    %v2324 = vsub.f32 2.0, %v2260
    %v2325 = vsub.f32 2.0, %v2261
    %v2326 = vsub.f32 2.0, %v2262
    %v2327 = vsub.f32 2.0, %v2263
    %v2328 = vsub.f32 2.0, %v2264
    %v2329 = vsub.f32 2.0, %v2265
    %v2330 = vsub.f32 2.0, %v2266
    %v2331 = vsub.f32 2.0, %v2267
    %v2332 = vsub.f32 2.0, %v2268
    %v2333 = vsub.f32 2.0, %v2269
    %v2334 = vsub.f32 2.0, %v2270
    %v2335 = vsub.f32 2.0, %v2271
    %v2336 = vsub.f32 2.0, %v2272
    %v2337 = vsub.f32 2.0, %v2273
    %v2338 = vsub.f32 2.0, %v2274
    %v2339 = vsub.f32 2.0, %v2275
    %v2340 = vsub.f32 2.0, %v2276
    %v2341 = vsub.f32 2.0, %v2277
    %v2342 = vsub.f32 2.0, %v2278
    %v2343 = vmax.f32 %v2279, 0.0
    %v2344 = vmax.f32 %v2280, 0.0
    %v2345 = vmax.f32 %v2281, 0.0
    %v2346 = vmax.f32 %v2282, 0.0
    %v2347 = vmax.f32 %v2283, 0.0
    %v2348 = vmax.f32 %v2284, 0.0
    %v2349 = vmax.f32 %v2285, 0.0
    %v2350 = vmax.f32 %v2286, 0.0
    %v2351 = vmax.f32 %v2287, 0.0
    %v2352 = vmax.f32 %v2288, 0.0
    %v2353 = vmax.f32 %v2289, 0.0
    %v2354 = vmax.f32 %v2290, 0.0
    %v2355 = vmax.f32 %v2291, 0.0
    %v2356 = vmax.f32 %v2292, 0.0
    %v2357 = vmax.f32 %v2293, 0.0
    %v2358 = vmax.f32 %v2294, 0.0
    %v2359 = vmax.f32 %v2295, 0.0
    %v2360 = vmax.f32 %v2296, 0.0
    %v2361 = vmax.f32 %v2297, 0.0
    %v2362 = vmax.f32 %v2298, 0.0
    %v2363 = vmax.f32 %v2299, 0.0
    %v2364 = vmax.f32 %v2300, 0.0
    %v2365 = vmax.f32 %v2301, 0.0
    %v2366 = vmax.f32 %v2302, 0.0
    %v2367 = vmax.f32 %v2303, 0.0
    %v2368 = vmax.f32 %v2304, 0.0
    %v2369 = vmax.f32 %v2305, 0.0
    %v2370 = vmax.f32 %v2306, 0.0
    %v2371 = vmax.f32 %v2307, 0.0
    %v2372 = vmax.f32 %v2308, 0.0
    %v2373 = vmax.f32 %v2309, 0.0
    %v2374 = vmax.f32 %v2310, 0.0
    %v2375 = vmax.f32 %v2311, 0.0
    %v2376 = vmax.f32 %v2312, 0.0
    %v2377 = vmax.f32 %v2313, 0.0
    %v2378 = vmax.f32 %v2314, 0.0
    %v2379 = vmax.f32 %v2315, 0.0
    %v2380 = vmax.f32 %v2316, 0.0
    %v2381 = vmax.f32 %v2317, 0.0
    %v2382 = vmax.f32 %v2318, 0.0
    %v2383 = vmax.f32 %v2319, 0.0
    %v2384 = vmax.f32 %v2320, 0.0
    %v2385 = vmax.f32 %v2321, 0.0
    %v2386 = vmax.f32 %v2322, 0.0
    %v2387 = vmax.f32 %v2323, 0.0
    %v2388 = vmax.f32 %v2324, 0.0
    %v2389 = vmax.f32 %v2325, 0.0
    %v2390 = vmax.f32 %v2326, 0.0
    %v2391 = vmax.f32 %v2327, 0.0
    %v2392 = vmax.f32 %v2328, 0.0
    %v2393 = vmax.f32 %v2329, 0.0
    %v2394 = vmax.f32 %v2330, 0.0
    %v2395 = vmax.f32 %v2331, 0.0
    %v2396 = vmax.f32 %v2332, 0.0
    %v2397 = vmax.f32 %v2333, 0.0
    %v2398 = vmax.f32 %v2334, 0.0
    %v2399 = vmax.f32 %v2335, 0.0
    %v2400 = vmax.f32 %v2336, 0.0
    %v2401 = vmax.f32 %v2337, 0.0
    %v2402 = vmax.f32 %v2338, 0.0
    %v2403 = vmax.f32 %v2339, 0.0
    %v2404 = vmax.f32 %v2340, 0.0
    %v2405 = vmax.f32 %v2341, 0.0
    %v2406 = vmax.f32 %v2342, 0.0
    %v2407 = vlaneseq
    %v2408 = vshrl.u32 %v2407, 7
    %v2409 = vadd.s32 %v2408, 8
    %v2410 = vadd.s32 %v2408, 16
    %v2411 = vadd.s32 %v2408, 24
    %v2412 = vadd.s32 %v2408, 32
    %v2413 = vadd.s32 %v2408, 40
    %v2414 = vadd.s32 %v2408, 48
    %v2415 = vadd.s32 %v2408, 56
    %v2416 = vadd.s32 %v2408, 64
    %v2417 = vadd.s32 %v2408, 72
    %v2418 = vadd.s32 %v2408, 80
    %v2419 = vadd.s32 %v2408, 88
    %v2420 = vadd.s32 %v2408, 96
    %v2421 = vadd.s32 %v2408, 104
    %v2422 = vadd.s32 %v2408, 112
    %v2423 = vadd.s32 %v2408, 120
    %v2424 = vadd.s32 %v2408, 128
    %v2425 = vadd.s32 %v2408, 136
    %v2426 = vadd.s32 %v2408, 144
    %v2427 = vadd.s32 %v2408, 152
    %v2428 = vadd.s32 %v2408, 160
    %v2429 = vadd.s32 %v2408, 168
    %v2430 = vadd.s32 %v2408, 176
    %v2431 = vadd.s32 %v2408, 184
    %v2432 = vadd.s32 %v2408, 192
    %v2433 = vadd.s32 %v2408, 200
    %v2434 = vadd.s32 %v2408, 208
    %v2435 = vadd.s32 %v2408, 216
    %v2436 = vadd.s32 %v2408, 224
    %v2437 = vadd.s32 %v2408, 232
    %v2438 = vadd.s32 %v2408, 240
    %v2439 = vadd.s32 %v2408, 248
    %v2440 = vlaneseq
    %v2441 = vand.u32 %v2440, 127
    %v2442 = vadd.s32 %v2441, 128
    %vm2443 = vcmp.eq.s32.totalorder %v2408, %v2441
    %vm2444 = vcmp.eq.s32.totalorder %v2408, %v2442
    %vm2445 = vcmp.eq.s32.totalorder %v2409, %v2441
    %vm2446 = vcmp.eq.s32.totalorder %v2409, %v2442
    %vm2447 = vcmp.eq.s32.totalorder %v2410, %v2441
    %vm2448 = vcmp.eq.s32.totalorder %v2410, %v2442
    %vm2449 = vcmp.eq.s32.totalorder %v2411, %v2441
    %vm2450 = vcmp.eq.s32.totalorder %v2411, %v2442
    %vm2451 = vcmp.eq.s32.totalorder %v2412, %v2441
    %vm2452 = vcmp.eq.s32.totalorder %v2412, %v2442
    %vm2453 = vcmp.eq.s32.totalorder %v2413, %v2441
    %vm2454 = vcmp.eq.s32.totalorder %v2413, %v2442
    %vm2455 = vcmp.eq.s32.totalorder %v2414, %v2441
    %vm2456 = vcmp.eq.s32.totalorder %v2414, %v2442
    %vm2457 = vcmp.eq.s32.totalorder %v2415, %v2441
    %vm2458 = vcmp.eq.s32.totalorder %v2415, %v2442
    %vm2459 = vcmp.eq.s32.totalorder %v2416, %v2441
    %vm2460 = vcmp.eq.s32.totalorder %v2416, %v2442
    %vm2461 = vcmp.eq.s32.totalorder %v2417, %v2441
    %vm2462 = vcmp.eq.s32.totalorder %v2417, %v2442
    %vm2463 = vcmp.eq.s32.totalorder %v2418, %v2441
    %vm2464 = vcmp.eq.s32.totalorder %v2418, %v2442
    %vm2465 = vcmp.eq.s32.totalorder %v2419, %v2441
    %vm2466 = vcmp.eq.s32.totalorder %v2419, %v2442
    %vm2467 = vcmp.eq.s32.totalorder %v2420, %v2441
    %vm2468 = vcmp.eq.s32.totalorder %v2420, %v2442
    %vm2469 = vcmp.eq.s32.totalorder %v2421, %v2441
    %vm2470 = vcmp.eq.s32.totalorder %v2421, %v2442
    %vm2471 = vcmp.eq.s32.totalorder %v2422, %v2441
    %vm2472 = vcmp.eq.s32.totalorder %v2422, %v2442
    %vm2473 = vcmp.eq.s32.totalorder %v2423, %v2441
    %vm2474 = vcmp.eq.s32.totalorder %v2423, %v2442
    %vm2475 = vcmp.eq.s32.totalorder %v2424, %v2441
    %vm2476 = vcmp.eq.s32.totalorder %v2424, %v2442
    %vm2477 = vcmp.eq.s32.totalorder %v2425, %v2441
    %vm2478 = vcmp.eq.s32.totalorder %v2425, %v2442
    %vm2479 = vcmp.eq.s32.totalorder %v2426, %v2441
    %vm2480 = vcmp.eq.s32.totalorder %v2426, %v2442
    %vm2481 = vcmp.eq.s32.totalorder %v2427, %v2441
    %vm2482 = vcmp.eq.s32.totalorder %v2427, %v2442
    %vm2483 = vcmp.eq.s32.totalorder %v2428, %v2441
    %vm2484 = vcmp.eq.s32.totalorder %v2428, %v2442
    %vm2485 = vcmp.eq.s32.totalorder %v2429, %v2441
    %vm2486 = vcmp.eq.s32.totalorder %v2429, %v2442
    %vm2487 = vcmp.eq.s32.totalorder %v2430, %v2441
    %vm2488 = vcmp.eq.s32.totalorder %v2430, %v2442
    %vm2489 = vcmp.eq.s32.totalorder %v2431, %v2441
    %vm2490 = vcmp.eq.s32.totalorder %v2431, %v2442
    %vm2491 = vcmp.eq.s32.totalorder %v2432, %v2441
    %vm2492 = vcmp.eq.s32.totalorder %v2432, %v2442
    %vm2493 = vcmp.eq.s32.totalorder %v2433, %v2441
    %vm2494 = vcmp.eq.s32.totalorder %v2433, %v2442
    %vm2495 = vcmp.eq.s32.totalorder %v2434, %v2441
    %vm2496 = vcmp.eq.s32.totalorder %v2434, %v2442
    %vm2497 = vcmp.eq.s32.totalorder %v2435, %v2441
    %vm2498 = vcmp.eq.s32.totalorder %v2435, %v2442
    %vm2499 = vcmp.eq.s32.totalorder %v2436, %v2441
    %vm2500 = vcmp.eq.s32.totalorder %v2436, %v2442
    %vm2501 = vcmp.eq.s32.totalorder %v2437, %v2441
    %vm2502 = vcmp.eq.s32.totalorder %v2437, %v2442
    %vm2503 = vcmp.eq.s32.totalorder %v2438, %v2441
    %vm2504 = vcmp.eq.s32.totalorder %v2438, %v2442
    %vm2505 = vcmp.eq.s32.totalorder %v2439, %v2441
    %vm2506 = vcmp.eq.s32.totalorder %v2439, %v2442
    %v2507 = vsel %vm2443, 1000.0, %v2343
    %v2508 = vsel %vm2444, 1000.0, %v2344
    %v2509 = vsel %vm2445, 1000.0, %v2345
    %v2510 = vsel %vm2446, 1000.0, %v2346
    %v2511 = vsel %vm2447, 1000.0, %v2347
    %v2512 = vsel %vm2448, 1000.0, %v2348
    %v2513 = vsel %vm2449, 1000.0, %v2349
    %v2514 = vsel %vm2450, 1000.0, %v2350
    %v2515 = vsel %vm2451, 1000.0, %v2351
    %v2516 = vsel %vm2452, 1000.0, %v2352
    %v2517 = vsel %vm2453, 1000.0, %v2353
    %v2518 = vsel %vm2454, 1000.0, %v2354
    %v2519 = vsel %vm2455, 1000.0, %v2355
    %v2520 = vsel %vm2456, 1000.0, %v2356
    %v2521 = vsel %vm2457, 1000.0, %v2357
    %v2522 = vsel %vm2458, 1000.0, %v2358
    %v2523 = vsel %vm2459, 1000.0, %v2359
    %v2524 = vsel %vm2460, 1000.0, %v2360
    %v2525 = vsel %vm2461, 1000.0, %v2361
    %v2526 = vsel %vm2462, 1000.0, %v2362
    %v2527 = vsel %vm2463, 1000.0, %v2363
    %v2528 = vsel %vm2464, 1000.0, %v2364
    %v2529 = vsel %vm2465, 1000.0, %v2365
    %v2530 = vsel %vm2466, 1000.0, %v2366
    %v2531 = vsel %vm2467, 1000.0, %v2367
    %v2532 = vsel %vm2468, 1000.0, %v2368
    %v2533 = vsel %vm2469, 1000.0, %v2369
    %v2534 = vsel %vm2470, 1000.0, %v2370
    %v2535 = vsel %vm2471, 1000.0, %v2371
    %v2536 = vsel %vm2472, 1000.0, %v2372
    %v2537 = vsel %vm2473, 1000.0, %v2373
    %v2538 = vsel %vm2474, 1000.0, %v2374
    %v2539 = vsel %vm2475, 1000.0, %v2375
    %v2540 = vsel %vm2476, 1000.0, %v2376
    %v2541 = vsel %vm2477, 1000.0, %v2377
    %v2542 = vsel %vm2478, 1000.0, %v2378
    %v2543 = vsel %vm2479, 1000.0, %v2379
    %v2544 = vsel %vm2480, 1000.0, %v2380
    %v2545 = vsel %vm2481, 1000.0, %v2381
    %v2546 = vsel %vm2482, 1000.0, %v2382
    %v2547 = vsel %vm2483, 1000.0, %v2383
    %v2548 = vsel %vm2484, 1000.0, %v2384
    %v2549 = vsel %vm2485, 1000.0, %v2385
    %v2550 = vsel %vm2486, 1000.0, %v2386
    %v2551 = vsel %vm2487, 1000.0, %v2387
    %v2552 = vsel %vm2488, 1000.0, %v2388
    %v2553 = vsel %vm2489, 1000.0, %v2389
    %v2554 = vsel %vm2490, 1000.0, %v2390
    %v2555 = vsel %vm2491, 1000.0, %v2391
    %v2556 = vsel %vm2492, 1000.0, %v2392
    %v2557 = vsel %vm2493, 1000.0, %v2393
    %v2558 = vsel %vm2494, 1000.0, %v2394
    %v2559 = vsel %vm2495, 1000.0, %v2395
    %v2560 = vsel %vm2496, 1000.0, %v2396
    %v2561 = vsel %vm2497, 1000.0, %v2397
    %v2562 = vsel %vm2498, 1000.0, %v2398
    %v2563 = vsel %vm2499, 1000.0, %v2399
    %v2564 = vsel %vm2500, 1000.0, %v2400
    %v2565 = vsel %vm2501, 1000.0, %v2401
    %v2566 = vsel %vm2502, 1000.0, %v2402
    %v2567 = vsel %vm2503, 1000.0, %v2403
    %v2568 = vsel %vm2504, 1000.0, %v2404
    %v2569 = vsel %vm2505, 1000.0, %v2405
    %v2570 = vsel %vm2506, 1000.0, %v2406
    %v2571 = vmin.f32 %v2507, %v2511
    %v2572 = vmin.f32 %v2509, %v2513
    %v2573 = vmin.f32 %v2571, %v2515
    %v2574 = vmin.f32 %v2572, %v2517
    %v2575 = vmin.f32 %v2573, %v2519
    %v2576 = vmin.f32 %v2574, %v2521
    %v2577 = vmin.f32 %v2575, %v2523
    %v2578 = vmin.f32 %v2576, %v2525
    %v2579 = vmin.f32 %v2577, %v2527
    %v2580 = vmin.f32 %v2578, %v2529
    %v2581 = vmin.f32 %v2579, %v2531
    %v2582 = vmin.f32 %v2580, %v2533
    %v2583 = vmin.f32 %v2581, %v2535
    %v2584 = vmin.f32 %v2582, %v2537
    %v2585 = vmin.f32 %v2583, %v2539
    %v2586 = vmin.f32 %v2584, %v2541
    %v2587 = vmin.f32 %v2585, %v2543
    %v2588 = vmin.f32 %v2586, %v2545
    %v2589 = vmin.f32 %v2587, %v2547
    %v2590 = vmin.f32 %v2588, %v2549
    %v2591 = vmin.f32 %v2589, %v2551
    %v2592 = vmin.f32 %v2590, %v2553
    %v2593 = vmin.f32 %v2591, %v2555
    %v2594 = vmin.f32 %v2592, %v2557
    %v2595 = vmin.f32 %v2593, %v2559
    %v2596 = vmin.f32 %v2594, %v2561
    %v2597 = vmin.f32 %v2595, %v2563
    %v2598 = vmin.f32 %v2596, %v2565
    %v2599 = vmin.f32 %v2597, %v2567
    %v2600 = vmin.f32 %v2598, %v2569
    %v2601 = vmin.f32 %v2599, %v2600
    %v2602 = vrot.slane %v2601, 4
    %v2603 = vmin.f32 %v2601, %v2602
    %v2604 = vrot.slane %v2603, 2
    %v2605 = vmin.f32 %v2603, %v2604
    %v2606 = vrot.slane %v2605, 1
    %v2607 = vmin.f32 %v2605, %v2606
    %v2608 = vmin.f32 %v2508, %v2512
    %v2609 = vmin.f32 %v2510, %v2514
    %v2610 = vmin.f32 %v2608, %v2516
    %v2611 = vmin.f32 %v2609, %v2518
    %v2612 = vmin.f32 %v2610, %v2520
    %v2613 = vmin.f32 %v2611, %v2522
    %v2614 = vmin.f32 %v2612, %v2524
    %v2615 = vmin.f32 %v2613, %v2526
    %v2616 = vmin.f32 %v2614, %v2528
    %v2617 = vmin.f32 %v2615, %v2530
    %v2618 = vmin.f32 %v2616, %v2532
    %v2619 = vmin.f32 %v2617, %v2534
    %v2620 = vmin.f32 %v2618, %v2536
    %v2621 = vmin.f32 %v2619, %v2538
    %v2622 = vmin.f32 %v2620, %v2540
    %v2623 = vmin.f32 %v2621, %v2542
    %v2624 = vmin.f32 %v2622, %v2544
    %v2625 = vmin.f32 %v2623, %v2546
    %v2626 = vmin.f32 %v2624, %v2548
    %v2627 = vmin.f32 %v2625, %v2550
    %v2628 = vmin.f32 %v2626, %v2552
    %v2629 = vmin.f32 %v2627, %v2554
    %v2630 = vmin.f32 %v2628, %v2556
    %v2631 = vmin.f32 %v2629, %v2558
    %v2632 = vmin.f32 %v2630, %v2560
    %v2633 = vmin.f32 %v2631, %v2562
    %v2634 = vmin.f32 %v2632, %v2564
    %v2635 = vmin.f32 %v2633, %v2566
    %v2636 = vmin.f32 %v2634, %v2568
    %v2637 = vmin.f32 %v2635, %v2570
    %v2638 = vmin.f32 %v2636, %v2637
    %v2639 = vrot.slane %v2638, 4
    %v2640 = vmin.f32 %v2638, %v2639
    %v2641 = vrot.slane %v2640, 2
    %v2642 = vmin.f32 %v2640, %v2641
    %v2643 = vrot.slane %v2642, 1
    %v2644 = vmin.f32 %v2642, %v2643
    %v2645 = vld [vmem:[%s0] sm:$0xff]
    %v2646 = vld [vmem:[%s0 + $0x8] sm:$0xff]
    %2647 = vset.pattern.permute.xlu0 0
    %2648 = vperm.xlu0 %2647, %v2645
    %v2649 = vpop.permute.xlu0 %2648
    %2650 = vset.pattern.permute.xlu0 0
    %2651 = vperm.xlu0 %2650, %v2646
    %v2652 = vpop.permute.xlu0 %2651
    %vm2653 = vcmp.eq.s32.totalorder %v2441, %v2649
    %vm2654 = vcmp.eq.s32.totalorder %v2442, %v2649
    %vm2655 = vcmp.eq.s32.totalorder %v2441, %v2652
    %vm2656 = vcmp.eq.s32.totalorder %v2442, %v2652
    %v2657 = vsel %vm2653, 1, 0
    %v2658 = vsel %vm2654, 1, 0
    %v2659 = vsel %vm2655, 1, 0
    %v2660 = vsel %vm2656, 1, 0
    %v2661 = vcvt.s32.f32 %v2657
    %v2662 = vcvt.s32.f32 %v2658
    %v2663 = vcvt.s32.f32 %v2659
    %v2664 = vcvt.s32.f32 %v2660
    %v2665 = vmul.f32 %v2661, %v2607
    %v2666 = vmul.f32 %v2662, %v2644
    %v2667 = vmul.f32 %v2663, %v2607
    %v2668 = vmul.f32 %v2664, %v2644
    %v2669 = vadd.f32 %v2665, %v2666
    %v2670 = vadd.f32 %v2669, %v2667
    %v2671 = vadd.f32 %v2670, %v2668
    %2672 = vadd.xlane.f32.xlu0 %v2671
    %v2673 = vpop.xlane.xlu0 %2672
    %v2674 = vrot.slane %v2673, 4
    %v2675 = vadd.f32 %v2673, %v2674
    %v2676 = vrot.slane %v2675, 2
    %v2677 = vadd.f32 %v2675, %v2676
    %v2678 = vrot.slane %v2677, 1
    %v2679 = vadd.f32 %v2677, %v2678
    %s2680 = vtos %v2679
    %v2681 = vstv %s2680
    %v2682 = vrcp.pop %v2681
    %v2683 = vmul.f32 %v2681, %v2682
    %v2684 = vsub.f32 1.0, %v2683
    %v2685 = vmul.f32 %v2682, %v2684
    %v2686 = vadd.f32 %v2682, %v2685
    %vm2687 = vweird.f32 %v2681
    %vm2688 = vweird.f32 %v2682
    %vm2689 = vmor %vm2687, %vm2688
    %v2690 = vsel %vm2689, %v2682, %v2686
    %v2691 = vand.u32 2147483647, %v2681
    %vm2692 = vcmp.eq.f32.partialorder %v2691, 8.507059e+37
    %v2693 = vand.u32 %v2681, 2147483648
    %v2694 = vor.u32 1.1754944e-38, %v2693
    %v2695 = vsel %vm2692, %v2694, %v2690
    %s2696 = vtos %v2695
    %s2697 = smul.f32 16.0, %s2696
    %s2698 = scalar_lea.smem [#allocation7], 0
    %2699 = sst [smem:[%s2698]] %s2697
    // Predicated region
    $region14: #{tpu_custom_call.1} parent=1 // pred_check
      _
    $region15: #{tpu_custom_call.1} parent=1 // pred_check_branch
      %2701 = sbr.rel (0) target = $region17
    $region16: #{tpu_custom_call.1} parent=1 // pred_region
      %2703 = vsyncadd [#allocation4], 0
      %s2704 = sshll.u32 [#allocation6], 4
      %s2705 = int_to_ptr.vmem [resolvable:$true] %s2704
      %s2706 = sshll.u32 %s2, 4
      %s2707 = int_to_ptr.hbm [resolvable:$true] %s2706
      %2712 = dma.vmem_to_hbm [thread:$0]  %s2705, 8192, %s2707, [#allocation4], 128, 128, 8
    $region17: #{tpu_custom_call.1} parent=1 // pred_fallthru
      _
    // Predicated region
    $region18: #{tpu_custom_call.1} parent=1 // pred_check
      _
    $region19: #{tpu_custom_call.1} parent=1 // pred_check_branch
      %2714 = sbr.rel (0) target = $region21
    $region20: #{tpu_custom_call.1} parent=1 // pred_region
      %2716 = vsyncadd [#allocation5], 0
      %s2718 = sshll.u32 %s3, 4
      %s2719 = int_to_ptr.hbm [resolvable:$true] %s2718
      %2721 = dma.smem_to_hbm [#allocation7], 16, %s2719, [#allocation5]
    $region21: #{tpu_custom_call.1} parent=1 // pred_fallthru
      _
    // Predicated region
    $region22: #{tpu_custom_call.1} parent=1 // pred_check
      _
    $region23: #{tpu_custom_call.1} parent=1 // pred_check_branch
      %2723 = sbr.rel (0) target = $region25
    $region24: #{tpu_custom_call.1} parent=1 // pred_region
      %2725 = dma.done [#allocation4], 8192
    $region25: #{tpu_custom_call.1} parent=1 // pred_fallthru
      _
    // Predicated region
    $region26: #{tpu_custom_call.1} parent=1 // pred_check
      _
    $region27: #{tpu_custom_call.1} parent=1 // pred_check_branch
      %2727 = sbr.rel (0) target = $region29
    $region28: #{tpu_custom_call.1} parent=1 // pred_region
      %2729 = dma.done [#allocation5], 16
    $region29: #{tpu_custom_call.1} parent=1 // pred_fallthru
      _
    %2730 = sfence
    %2731 = vsyncpa [#allocation3], 1
    %2732 = vsyncpa [#allocation4], 1
    %2733 = vsyncpa [#allocation5], 1

</llo_original>
